<compile_context>
chip_gen: v7x
topology: tpu7x:2x2x1
jax: 0.10.0
libtpu: 0.0.40
codegen_flags: <defaults>
</compile_context>

<pallas_src>
import functools

import numpy as np
import jax
import jax.numpy as jnp
from jax.experimental import pallas as pl
from jax.experimental.pallas import tpu as pltpu


# ------------------------------ fused kernel --------------------------------

def _mvcnn_fused_kernel(l0_ref, l1_ref, r0_ref, r1_ref, bconv_ref,
                        w1_ref, b1_ref, w2_ref, b2_ref, wc_ref, bc_ref,
                        logits_ref, lastfc_ref, *, views, bpad, t_blocks, sc):
    """Whole MVCNN forward on VMEM-resident 2-D slabs.

    l{0,1}: (T*Nrows, Kpad)  rows=(t=h//2, n=v*bpad+b), cols=(kh, wp, c) zero-padded
    r{0,1}: (Kpad, S*Cout)   banded conv weights, cols=(w2=w//2, cout)
    max over the four l_i @ r_j == conv3x3(SAME) followed by 2x2 maxpool.
    """
    f32 = jnp.float32
    l0 = l0_ref[...]
    l1 = l1_ref[...]
    r0 = r0_ref[...]
    r1 = r1_ref[...]

    # conv3x3 + ReLU + 2x2 maxpool (max of the four pooling parities).
    y = jnp.dot(l0, r0, preferred_element_type=f32)
    y = jnp.maximum(y, jnp.dot(l0, r1, preferred_element_type=f32))
    y = jnp.maximum(y, jnp.dot(l1, r0, preferred_element_type=f32))
    y = jnp.maximum(y, jnp.dot(l1, r1, preferred_element_type=f32))
    feat = jnp.maximum(y + bconv_ref[...], 0.0)            # (T*Nrows, S*Cout)

    nrows = feat.shape[0] // t_blocks                       # = views * bpad

    # fc1 + ReLU: contract over (t, w2, cout); t lives on 8-aligned row blocks.
    w1 = w1_ref[...]
    h1 = jnp.dot(feat[0:nrows, :], w1[0:sc, :], preferred_element_type=f32)
    for t in range(1, t_blocks):
        h1 = h1 + jnp.dot(feat[t * nrows:(t + 1) * nrows, :],
                          w1[t * sc:(t + 1) * sc, :],
                          preferred_element_type=f32)
    h1 = jnp.maximum(h1 + b1_ref[...], 0.0)                 # (Nrows, hidden)

    # fc2 + ReLU  (feature columns already padded to a 128 lane multiple)
    h2 = jnp.maximum(jnp.dot(h1, w2_ref[...], preferred_element_type=f32)
                     + b2_ref[...], 0.0)                    # (Nrows, feat_pad)

    # view pooling: max over the V contiguous (8-aligned) row blocks.
    m = h2[0:bpad, :]
    for v in range(1, views):
        m = jnp.maximum(m, h2[v * bpad:(v + 1) * bpad, :])
    lastfc_ref[...] = m.astype(lastfc_ref.dtype)            # rows/cols >= real are padding

    # classifier (column count padded to a 128 lane multiple)
    logits_ref[...] = (jnp.dot(m, wc_ref[...], preferred_element_type=f32)
                       + bc_ref[...]).astype(logits_ref.dtype)


# ------------------------------- JAX wrapper ---------------------------------

def _round_up(x, m):
    return (x + m - 1) // m * m


def mvcnn_shrec17_forward(params, x):
    """x: (B, V, C, H, W) f32 -> (logits (B, 55), last_fc (B, feature_len))."""
    B, V, C, H, W = x.shape
    conv_w = params["conv_w"]                    # (3, 3, C, Cout)  HWIO
    conv_b = params["conv_b"]
    KH, KW, _, Cout = conv_w.shape
    T, S = H // 2, W // 2                        # pooled spatial dims
    Wp = W + 2                                   # SAME-padded width
    sc = S * Cout                                # flattened width per t-row-block
    flat = T * sc
    assert params["fc1_w"].shape[0] == flat

    hidden = params["fc1_w"].shape[1]
    feat_len = params["fc2_w"].shape[1]
    n_cls = params["cls_w"].shape[1]

    bpad = _round_up(B, 8)                       # 8-aligned per-view row block
    nrows = V * bpad

    # Lane-dense output widths (unmasked vst for both HBM writebacks).
    feat_pad = _round_up(feat_len, 128)
    cls_pad = _round_up(n_cls, 128)

    # NHWC, view-major rows (n = v*bpad + b), batch padded, spatial SAME padding.
    xv = x.transpose(1, 0, 3, 4, 2)                                  # (V,B,H,W,C)
    xv = jnp.pad(xv, ((0, 0), (0, bpad - B), (1, 1), (1, 1), (0, 0)))
    xv = xv.reshape(nrows, H + 2, Wp, C)

    k_real = KH * Wp * C
    k_pad = _round_up(k_real, 128)               # full lane groups on the LHS slabs

    def build_lhs(i):
        # L_i[(t, n), (kh, wp, c)] = xv[n, 2t + i + kh, wp, c]
        parts = []
        for kh in range(KH):
            sl = xv[:, i + kh: i + kh + 2 * T - 1: 2, :, :]          # (nrows,T,Wp,C)
            parts.append(sl.transpose(1, 0, 2, 3).reshape(T * nrows, Wp * C))
        lhs = jnp.concatenate(parts, axis=1)                         # (T*nrows, k_real)
        return jnp.pad(lhs, ((0, 0), (0, k_pad - k_real)))

    def build_rhs(j):
        # R_j[(kh, wp, c), (w2, co)] = conv_w[kh, wp-(2*w2+j), c, co] inside the band.
        sel = np.zeros((Wp, KW, S), np.float32)
        for w2 in range(S):
            for kw in range(KW):
                sel[2 * w2 + j + kw, kw, w2] = 1.0
        r = jnp.einsum("pkw,hkco->hpcwo", jnp.asarray(sel), conv_w)
        r = r.reshape(k_real, sc)
        return jnp.pad(r, ((0, k_pad - k_real), (0, 0)))

    l0, l1 = build_lhs(0), build_lhs(1)
    r0, r1 = build_rhs(0), build_rhs(1)
    bconv = jnp.tile(conv_b, S).reshape(1, sc)   # bias laid out over (w2, cout) cols

    # Zero-padded weight/bias columns -> padded output columns are exactly 0.
    w2p = jnp.pad(params["fc2_w"], ((0, 0), (0, feat_pad - feat_len)))
    b2p = jnp.pad(params["fc2_b"], ((0, feat_pad - feat_len),)).reshape(1, feat_pad)
    wcp = jnp.pad(params["cls_w"],
                  ((0, feat_pad - feat_len), (0, cls_pad - n_cls)))
    bcp = jnp.pad(params["cls_b"], ((0, cls_pad - n_cls),)).reshape(1, cls_pad)

    kernel = functools.partial(_mvcnn_fused_kernel, views=V, bpad=bpad,
                               t_blocks=T, sc=sc)

    def spec(shape):
        return pl.BlockSpec(shape, lambda i: (0,) * len(shape))

    logits_pad, lastfc_pad = pl.pallas_call(
        kernel,
        out_shape=(jax.ShapeDtypeStruct((bpad, cls_pad), jnp.float32),
                   jax.ShapeDtypeStruct((bpad, feat_pad), jnp.float32)),
        grid=(1,),
        in_specs=[spec((T * nrows, k_pad)), spec((T * nrows, k_pad)),
                  spec((k_pad, sc)), spec((k_pad, sc)), spec((1, sc)),
                  spec((flat, hidden)), spec((1, hidden)),
                  spec((hidden, feat_pad)), spec((1, feat_pad)),
                  spec((feat_pad, cls_pad)), spec((1, cls_pad))],
        out_specs=(spec((bpad, cls_pad)), spec((bpad, feat_pad))),
        compiler_params=pltpu.CompilerParams(
            dimension_semantics=("arbitrary",)),
    )(l0, l1, r0, r1, bconv,
      params["fc1_w"], params["fc1_b"].reshape(1, hidden),
      w2p, b2p, wcp, bcp)

    return logits_pad[:B, :n_cls], lastfc_pad[:B, :feat_len]


# --------------------------- model params (synthetic) ------------------------

def init_params(key, *, in_ch=3, conv_ch=8, H=16, W=16,
                hidden=64, feature_len=64, num_classes=55):
    ks = jax.random.split(key, 8)
    flat = conv_ch * (H // 2) * (W // 2)
    return {
        "conv_w": 0.10 * jax.random.normal(ks[0], (3, 3, in_ch, conv_ch), jnp.float32),
        "conv_b": 0.01 * jax.random.normal(ks[1], (conv_ch,), jnp.float32),
        "fc1_w":  0.05 * jax.random.normal(ks[2], (flat, hidden), jnp.float32),
        "fc1_b":  0.01 * jax.random.normal(ks[3], (hidden,), jnp.float32),
        "fc2_w":  0.05 * jax.random.normal(ks[4], (hidden, feature_len), jnp.float32),
        "fc2_b":  0.01 * jax.random.normal(ks[5], (feature_len,), jnp.float32),
        "cls_w":  0.05 * jax.random.normal(ks[6], (feature_len, num_classes), jnp.float32),
        "cls_b":  0.01 * jax.random.normal(ks[7], (num_classes,), jnp.float32),
    }


# ------------------------------ pure-JAX reference ---------------------------

def mvcnn_shrec17_reference(params, x):
    B, V, C, H, W = x.shape
    xf = x.transpose(0, 1, 3, 4, 2).reshape(B * V, H, W, C)          # NHWC
    feat = jax.lax.conv_general_dilated(
        xf, params["conv_w"], window_strides=(1, 1), padding="SAME",
        dimension_numbers=("NHWC", "HWIO", "NHWC"),
        preferred_element_type=jnp.float32)
    feat = jnp.maximum(feat + params["conv_b"], 0.0)
    feat = feat.reshape(B * V, H // 2, 2, W // 2, 2, -1).max(axis=(2, 4))
    feat = feat.reshape(B * V, -1)                                   # (t, w2, cout)
    feat = jnp.maximum(feat @ params["fc1_w"] + params["fc1_b"], 0.0)
    feat = jnp.maximum(feat @ params["fc2_w"] + params["fc2_b"], 0.0)
    last_fc = feat.reshape(B, V, -1).max(axis=1)
    logits = last_fc @ params["cls_w"] + params["cls_b"]
    return logits, last_fc


# ----------------------------------- main ------------------------------------

if __name__ == "__main__":
    key = jax.random.PRNGKey(0)
    k_x, k_p = jax.random.split(key)

    B, V, C, H, W = 2, 3, 3, 16, 16        # batch=2, 3 views, 3x16x16 images
    x = jax.random.normal(k_x, (B, V, C, H, W), jnp.float32)
    params = init_params(k_p, in_ch=C, H=H, W=W)

    logits, last_fc = jax.jit(mvcnn_shrec17_forward)(params, x)
    jax.block_until_ready((logits, last_fc))

    ref_logits, ref_last_fc = jax.jit(mvcnn_shrec17_reference)(params, x)
    assert logits.shape == (B, 55) and last_fc.shape == (B, 64)
    assert jnp.allclose(logits, ref_logits, rtol=5e-2, atol=5e-3), \
        float(jnp.max(jnp.abs(logits - ref_logits)))
    assert jnp.allclose(last_fc, ref_last_fc, rtol=5e-2, atol=5e-3), \
        float(jnp.max(jnp.abs(last_fc - ref_last_fc)))

    print("KERNEL_OK")
</pallas_src>

<mosaic_0001>
module attributes {stable_mosaic.version = 11 : i64} {
  func.func @_mvcnn_fused_kernel(%arg0: i32, %arg1: memref<192x256xf32, #tpu.memory_space<vmem>>, %arg2: memref<192x256xf32, #tpu.memory_space<vmem>>, %arg3: memref<256x64xf32, #tpu.memory_space<vmem>>, %arg4: memref<256x64xf32, #tpu.memory_space<vmem>>, %arg5: memref<1x64xf32, #tpu.memory_space<vmem>>, %arg6: memref<512x64xf32, #tpu.memory_space<vmem>>, %arg7: memref<1x64xf32, #tpu.memory_space<vmem>>, %arg8: memref<64x128xf32, #tpu.memory_space<vmem>>, %arg9: memref<1x128xf32, #tpu.memory_space<vmem>>, %arg10: memref<128x128xf32, #tpu.memory_space<vmem>>, %arg11: memref<1x128xf32, #tpu.memory_space<vmem>>, %arg12: memref<8x128xf32, #tpu.memory_space<vmem>>, %arg13: memref<8x128xf32, #tpu.memory_space<vmem>>) attributes {dimension_semantics = [#tpu.dimension_semantics<arbitrary>], iteration_bounds = array<i64: 1>, scalar_prefetch = 0 : i64, scratch_operands = 0 : i64, tpu.core_type = #tpu.core_type<tc>, window_params = [{pipeline_mode = #tpu.pipeline_mode<synchronous>, transform_indices = @transform_0, window_bounds = array<i64: 192, 256>}, {pipeline_mode = #tpu.pipeline_mode<synchronous>, transform_indices = @transform_1, window_bounds = array<i64: 192, 256>}, {pipeline_mode = #tpu.pipeline_mode<synchronous>, transform_indices = @transform_2, window_bounds = array<i64: 256, 64>}, {pipeline_mode = #tpu.pipeline_mode<synchronous>, transform_indices = @transform_3, window_bounds = array<i64: 256, 64>}, {pipeline_mode = #tpu.pipeline_mode<synchronous>, transform_indices = @transform_4, window_bounds = array<i64: 1, 64>}, {pipeline_mode = #tpu.pipeline_mode<synchronous>, transform_indices = @transform_5, window_bounds = array<i64: 512, 64>}, {pipeline_mode = #tpu.pipeline_mode<synchronous>, transform_indices = @transform_6, window_bounds = array<i64: 1, 64>}, {pipeline_mode = #tpu.pipeline_mode<synchronous>, transform_indices = @transform_7, window_bounds = array<i64: 64, 128>}, {pipeline_mode = #tpu.pipeline_mode<synchronous>, transform_indices = @transform_8, window_bounds = array<i64: 1, 128>}, {pipeline_mode = #tpu.pipeline_mode<synchronous>, transform_indices = @transform_9, window_bounds = array<i64: 128, 128>}, {pipeline_mode = #tpu.pipeline_mode<synchronous>, transform_indices = @transform_10, window_bounds = array<i64: 1, 128>}, {pipeline_mode = #tpu.pipeline_mode<synchronous>, transform_indices = @transform_11, window_bounds = array<i64: 8, 128>}, {pipeline_mode = #tpu.pipeline_mode<synchronous>, transform_indices = @transform_12, window_bounds = array<i64: 8, 128>}]} {
    %c0 = arith.constant 0 : index
    %c0_0 = arith.constant 0 : index
    %0 = vector.load %arg1[%c0, %c0_0] : memref<192x256xf32, #tpu.memory_space<vmem>>, vector<192x256xf32>
    %c0_1 = arith.constant 0 : index
    %c0_2 = arith.constant 0 : index
    %1 = vector.load %arg2[%c0_1, %c0_2] : memref<192x256xf32, #tpu.memory_space<vmem>>, vector<192x256xf32>
    %c0_3 = arith.constant 0 : index
    %c0_4 = arith.constant 0 : index
    %2 = vector.load %arg3[%c0_3, %c0_4] : memref<256x64xf32, #tpu.memory_space<vmem>>, vector<256x64xf32>
    %c0_5 = arith.constant 0 : index
    %c0_6 = arith.constant 0 : index
    %3 = vector.load %arg4[%c0_5, %c0_6] : memref<256x64xf32, #tpu.memory_space<vmem>>, vector<256x64xf32>
    %cst = arith.constant dense<0.000000e+00> : vector<192x64xf32>
    %4 = tpu.matmul %0, %2, %cst {dimension_numbers = #tpu.dot_dimension_numbers<[1], [0], [0], [1], [0, 0, 1, 1], [], []>} : vector<192x256xf32>, vector<256x64xf32>, vector<192x64xf32> -> vector<192x64xf32>
    %cst_7 = arith.constant dense<0.000000e+00> : vector<192x64xf32>
    %5 = tpu.matmul %0, %3, %cst_7 {dimension_numbers = #tpu.dot_dimension_numbers<[1], [0], [0], [1], [0, 0, 1, 1], [], []>} : vector<192x256xf32>, vector<256x64xf32>, vector<192x64xf32> -> vector<192x64xf32>
    %6 = arith.maximumf %4, %5 : vector<192x64xf32>
    %cst_8 = arith.constant dense<0.000000e+00> : vector<192x64xf32>
    %7 = tpu.matmul %1, %2, %cst_8 {dimension_numbers = #tpu.dot_dimension_numbers<[1], [0], [0], [1], [0, 0, 1, 1], [], []>} : vector<192x256xf32>, vector<256x64xf32>, vector<192x64xf32> -> vector<192x64xf32>
    %8 = arith.maximumf %6, %7 : vector<192x64xf32>
    %cst_9 = arith.constant dense<0.000000e+00> : vector<192x64xf32>
    %9 = tpu.matmul %1, %3, %cst_9 {dimension_numbers = #tpu.dot_dimension_numbers<[1], [0], [0], [1], [0, 0, 1, 1], [], []>} : vector<192x256xf32>, vector<256x64xf32>, vector<192x64xf32> -> vector<192x64xf32>
    %10 = arith.maximumf %8, %9 : vector<192x64xf32>
    %c0_10 = arith.constant 0 : index
    %c0_11 = arith.constant 0 : index
    %11 = vector.load %arg5[%c0_10, %c0_11] : memref<1x64xf32, #tpu.memory_space<vmem>>, vector<1x64xf32>
    %12 = vector.broadcast %11 : vector<1x64xf32> to vector<192x64xf32>
    %13 = arith.addf %10, %12 : vector<192x64xf32>
    %cst_12 = arith.constant 0.000000e+00 : f32
    %14 = vector.broadcast %cst_12 : f32 to vector<192x64xf32>
    %15 = arith.maximumf %13, %14 : vector<192x64xf32>
    %c0_13 = arith.constant 0 : index
    %c0_14 = arith.constant 0 : index
    %16 = vector.load %arg6[%c0_13, %c0_14] : memref<512x64xf32, #tpu.memory_space<vmem>>, vector<512x64xf32>
    %17 = vector.extract_strided_slice %15 {offsets = [0, 0], sizes = [24, 64], strides = [1, 1]} : vector<192x64xf32> to vector<24x64xf32>
    %18 = vector.extract_strided_slice %16 {offsets = [0, 0], sizes = [64, 64], strides = [1, 1]} : vector<512x64xf32> to vector<64x64xf32>
    %cst_15 = arith.constant dense<0.000000e+00> : vector<24x64xf32>
    %19 = tpu.matmul %17, %18, %cst_15 {dimension_numbers = #tpu.dot_dimension_numbers<[1], [0], [0], [1], [0, 0, 1, 1], [], []>} : vector<24x64xf32>, vector<64x64xf32>, vector<24x64xf32> -> vector<24x64xf32>
    %20 = vector.extract_strided_slice %15 {offsets = [24, 0], sizes = [24, 64], strides = [1, 1]} : vector<192x64xf32> to vector<24x64xf32>
    %21 = vector.extract_strided_slice %16 {offsets = [64, 0], sizes = [64, 64], strides = [1, 1]} : vector<512x64xf32> to vector<64x64xf32>
    %cst_16 = arith.constant dense<0.000000e+00> : vector<24x64xf32>
    %22 = tpu.matmul %20, %21, %cst_16 {dimension_numbers = #tpu.dot_dimension_numbers<[1], [0], [0], [1], [0, 0, 1, 1], [], []>} : vector<24x64xf32>, vector<64x64xf32>, vector<24x64xf32> -> vector<24x64xf32>
    %23 = arith.addf %19, %22 : vector<24x64xf32>
    %24 = vector.extract_strided_slice %15 {offsets = [48, 0], sizes = [24, 64], strides = [1, 1]} : vector<192x64xf32> to vector<24x64xf32>
    %25 = vector.extract_strided_slice %16 {offsets = [128, 0], sizes = [64, 64], strides = [1, 1]} : vector<512x64xf32> to vector<64x64xf32>
    %cst_17 = arith.constant dense<0.000000e+00> : vector<24x64xf32>
    %26 = tpu.matmul %24, %25, %cst_17 {dimension_numbers = #tpu.dot_dimension_numbers<[1], [0], [0], [1], [0, 0, 1, 1], [], []>} : vector<24x64xf32>, vector<64x64xf32>, vector<24x64xf32> -> vector<24x64xf32>
    %27 = arith.addf %23, %26 : vector<24x64xf32>
    %28 = vector.extract_strided_slice %15 {offsets = [72, 0], sizes = [24, 64], strides = [1, 1]} : vector<192x64xf32> to vector<24x64xf32>
    %29 = vector.extract_strided_slice %16 {offsets = [192, 0], sizes = [64, 64], strides = [1, 1]} : vector<512x64xf32> to vector<64x64xf32>
    %cst_18 = arith.constant dense<0.000000e+00> : vector<24x64xf32>
    %30 = tpu.matmul %28, %29, %cst_18 {dimension_numbers = #tpu.dot_dimension_numbers<[1], [0], [0], [1], [0, 0, 1, 1], [], []>} : vector<24x64xf32>, vector<64x64xf32>, vector<24x64xf32> -> vector<24x64xf32>
    %31 = arith.addf %27, %30 : vector<24x64xf32>
    %32 = vector.extract_strided_slice %15 {offsets = [96, 0], sizes = [24, 64], strides = [1, 1]} : vector<192x64xf32> to vector<24x64xf32>
    %33 = vector.extract_strided_slice %16 {offsets = [256, 0], sizes = [64, 64], strides = [1, 1]} : vector<512x64xf32> to vector<64x64xf32>
    %cst_19 = arith.constant dense<0.000000e+00> : vector<24x64xf32>
    %34 = tpu.matmul %32, %33, %cst_19 {dimension_numbers = #tpu.dot_dimension_numbers<[1], [0], [0], [1], [0, 0, 1, 1], [], []>} : vector<24x64xf32>, vector<64x64xf32>, vector<24x64xf32> -> vector<24x64xf32>
    %35 = arith.addf %31, %34 : vector<24x64xf32>
    %36 = vector.extract_strided_slice %15 {offsets = [120, 0], sizes = [24, 64], strides = [1, 1]} : vector<192x64xf32> to vector<24x64xf32>
    %37 = vector.extract_strided_slice %16 {offsets = [320, 0], sizes = [64, 64], strides = [1, 1]} : vector<512x64xf32> to vector<64x64xf32>
    %cst_20 = arith.constant dense<0.000000e+00> : vector<24x64xf32>
    %38 = tpu.matmul %36, %37, %cst_20 {dimension_numbers = #tpu.dot_dimension_numbers<[1], [0], [0], [1], [0, 0, 1, 1], [], []>} : vector<24x64xf32>, vector<64x64xf32>, vector<24x64xf32> -> vector<24x64xf32>
    %39 = arith.addf %35, %38 : vector<24x64xf32>
    %40 = vector.extract_strided_slice %15 {offsets = [144, 0], sizes = [24, 64], strides = [1, 1]} : vector<192x64xf32> to vector<24x64xf32>
    %41 = vector.extract_strided_slice %16 {offsets = [384, 0], sizes = [64, 64], strides = [1, 1]} : vector<512x64xf32> to vector<64x64xf32>
    %cst_21 = arith.constant dense<0.000000e+00> : vector<24x64xf32>
    %42 = tpu.matmul %40, %41, %cst_21 {dimension_numbers = #tpu.dot_dimension_numbers<[1], [0], [0], [1], [0, 0, 1, 1], [], []>} : vector<24x64xf32>, vector<64x64xf32>, vector<24x64xf32> -> vector<24x64xf32>
    %43 = arith.addf %39, %42 : vector<24x64xf32>
    %44 = vector.extract_strided_slice %15 {offsets = [168, 0], sizes = [24, 64], strides = [1, 1]} : vector<192x64xf32> to vector<24x64xf32>
    %45 = vector.extract_strided_slice %16 {offsets = [448, 0], sizes = [64, 64], strides = [1, 1]} : vector<512x64xf32> to vector<64x64xf32>
    %cst_22 = arith.constant dense<0.000000e+00> : vector<24x64xf32>
    %46 = tpu.matmul %44, %45, %cst_22 {dimension_numbers = #tpu.dot_dimension_numbers<[1], [0], [0], [1], [0, 0, 1, 1], [], []>} : vector<24x64xf32>, vector<64x64xf32>, vector<24x64xf32> -> vector<24x64xf32>
    %47 = arith.addf %43, %46 : vector<24x64xf32>
    %c0_23 = arith.constant 0 : index
    %c0_24 = arith.constant 0 : index
    %48 = vector.load %arg7[%c0_23, %c0_24] : memref<1x64xf32, #tpu.memory_space<vmem>>, vector<1x64xf32>
    %49 = vector.broadcast %48 : vector<1x64xf32> to vector<24x64xf32>
    %50 = arith.addf %47, %49 : vector<24x64xf32>
    %cst_25 = arith.constant 0.000000e+00 : f32
    %51 = vector.broadcast %cst_25 : f32 to vector<24x64xf32>
    %52 = arith.maximumf %50, %51 : vector<24x64xf32>
    %c0_26 = arith.constant 0 : index
    %c0_27 = arith.constant 0 : index
    %53 = vector.load %arg8[%c0_26, %c0_27] : memref<64x128xf32, #tpu.memory_space<vmem>>, vector<64x128xf32>
    %cst_28 = arith.constant dense<0.000000e+00> : vector<24x128xf32>
    %54 = tpu.matmul %52, %53, %cst_28 {dimension_numbers = #tpu.dot_dimension_numbers<[1], [0], [0], [1], [0, 0, 1, 1], [], []>} : vector<24x64xf32>, vector<64x128xf32>, vector<24x128xf32> -> vector<24x128xf32>
    %c0_29 = arith.constant 0 : index
    %c0_30 = arith.constant 0 : index
    %55 = vector.load %arg9[%c0_29, %c0_30] : memref<1x128xf32, #tpu.memory_space<vmem>>, vector<1x128xf32>
    %56 = vector.broadcast %55 : vector<1x128xf32> to vector<24x128xf32>
    %57 = arith.addf %54, %56 : vector<24x128xf32>
    %cst_31 = arith.constant 0.000000e+00 : f32
    %58 = vector.broadcast %cst_31 : f32 to vector<24x128xf32>
    %59 = arith.maximumf %57, %58 : vector<24x128xf32>
    %60 = vector.extract_strided_slice %59 {offsets = [0, 0], sizes = [8, 128], strides = [1, 1]} : vector<24x128xf32> to vector<8x128xf32>
    %61 = vector.extract_strided_slice %59 {offsets = [8, 0], sizes = [8, 128], strides = [1, 1]} : vector<24x128xf32> to vector<8x128xf32>
    %62 = arith.maximumf %60, %61 : vector<8x128xf32>
    %63 = vector.extract_strided_slice %59 {offsets = [16, 0], sizes = [8, 128], strides = [1, 1]} : vector<24x128xf32> to vector<8x128xf32>
    %64 = arith.maximumf %62, %63 : vector<8x128xf32>
    %c0_32 = arith.constant 0 : index
    %c0_33 = arith.constant 0 : index
    %65 = vector.load %arg13[%c0_32, %c0_33] : memref<8x128xf32, #tpu.memory_space<vmem>>, vector<8x128xf32>
    tpu.vector_store %arg13[%c0_32, %c0_33], %64 {strides = array<i32>} : memref<8x128xf32, #tpu.memory_space<vmem>>, vector<8x128xf32>,
    %c0_34 = arith.constant 0 : index
    %c0_35 = arith.constant 0 : index
    %66 = vector.load %arg10[%c0_34, %c0_35] : memref<128x128xf32, #tpu.memory_space<vmem>>, vector<128x128xf32>
    %cst_36 = arith.constant dense<0.000000e+00> : vector<8x128xf32>
    %67 = tpu.matmul %64, %66, %cst_36 {dimension_numbers = #tpu.dot_dimension_numbers<[1], [0], [0], [1], [0, 0, 1, 1], [], []>} : vector<8x128xf32>, vector<128x128xf32>, vector<8x128xf32> -> vector<8x128xf32>
    %c0_37 = arith.constant 0 : index
    %c0_38 = arith.constant 0 : index
    %68 = vector.load %arg11[%c0_37, %c0_38] : memref<1x128xf32, #tpu.memory_space<vmem>>, vector<1x128xf32>
    %69 = vector.broadcast %68 : vector<1x128xf32> to vector<8x128xf32>
    %70 = arith.addf %67, %69 : vector<8x128xf32>
    %c0_39 = arith.constant 0 : index
    %c0_40 = arith.constant 0 : index
    %71 = vector.load %arg12[%c0_39, %c0_40] : memref<8x128xf32, #tpu.memory_space<vmem>>, vector<8x128xf32>
    tpu.vector_store %arg12[%c0_39, %c0_40], %70 {strides = array<i32>} : memref<8x128xf32, #tpu.memory_space<vmem>>, vector<8x128xf32>,
    return
  }
  func.func @transform_0(%arg0: i32) -> (i32, i32) {
    %c0_i32 = arith.constant 0 : i32
    %c0_i32_0 = arith.constant 0 : i32
    %c0_i32_1 = arith.constant 0 : i32
    return %c0_i32, %c0_i32_0 : i32, i32
  }
  func.func @transform_1(%arg0: i32) -> (i32, i32) {
    %c0_i32 = arith.constant 0 : i32
    %c0_i32_0 = arith.constant 0 : i32
    %c0_i32_1 = arith.constant 0 : i32
    return %c0_i32, %c0_i32_0 : i32, i32
  }
  func.func @transform_2(%arg0: i32) -> (i32, i32) {
    %c0_i32 = arith.constant 0 : i32
    %c0_i32_0 = arith.constant 0 : i32
    %c0_i32_1 = arith.constant 0 : i32
    return %c0_i32, %c0_i32_0 : i32, i32
  }
  func.func @transform_3(%arg0: i32) -> (i32, i32) {
    %c0_i32 = arith.constant 0 : i32
    %c0_i32_0 = arith.constant 0 : i32
    %c0_i32_1 = arith.constant 0 : i32
    return %c0_i32, %c0_i32_0 : i32, i32
  }
  func.func @transform_4(%arg0: i32) -> (i32, i32) {
    %c0_i32 = arith.constant 0 : i32
    %c0_i32_0 = arith.constant 0 : i32
    %c0_i32_1 = arith.constant 0 : i32
    return %c0_i32, %c0_i32_0 : i32, i32
  }
  func.func @transform_5(%arg0: i32) -> (i32, i32) {
    %c0_i32 = arith.constant 0 : i32
    %c0_i32_0 = arith.constant 0 : i32
    %c0_i32_1 = arith.constant 0 : i32
    return %c0_i32, %c0_i32_0 : i32, i32
  }
  func.func @transform_6(%arg0: i32) -> (i32, i32) {
    %c0_i32 = arith.constant 0 : i32
    %c0_i32_0 = arith.constant 0 : i32
    %c0_i32_1 = arith.constant 0 : i32
    return %c0_i32, %c0_i32_0 : i32, i32
  }
  func.func @transform_7(%arg0: i32) -> (i32, i32) {
    %c0_i32 = arith.constant 0 : i32
    %c0_i32_0 = arith.constant 0 : i32
    %c0_i32_1 = arith.constant 0 : i32
    return %c0_i32, %c0_i32_0 : i32, i32
  }
  func.func @transform_8(%arg0: i32) -> (i32, i32) {
    %c0_i32 = arith.constant 0 : i32
    %c0_i32_0 = arith.constant 0 : i32
    %c0_i32_1 = arith.constant 0 : i32
    return %c0_i32, %c0_i32_0 : i32, i32
  }
  func.func @transform_9(%arg0: i32) -> (i32, i32) {
    %c0_i32 = arith.constant 0 : i32
    %c0_i32_0 = arith.constant 0 : i32
    %c0_i32_1 = arith.constant 0 : i32
    return %c0_i32, %c0_i32_0 : i32, i32
  }
  func.func @transform_10(%arg0: i32) -> (i32, i32) {
    %c0_i32 = arith.constant 0 : i32
    %c0_i32_0 = arith.constant 0 : i32
    %c0_i32_1 = arith.constant 0 : i32
    return %c0_i32, %c0_i32_0 : i32, i32
  }
  func.func @transform_11(%arg0: i32) -> (i32, i32) {
    %c0_i32 = arith.constant 0 : i32
    %c0_i32_0 = arith.constant 0 : i32
    %c0_i32_1 = arith.constant 0 : i32
    return %c0_i32, %c0_i32_0 : i32, i32
  }
  func.func @transform_12(%arg0: i32) -> (i32, i32) {
    %c0_i32 = arith.constant 0 : i32
    %c0_i32_0 = arith.constant 0 : i32
    %c0_i32_1 = arith.constant 0 : i32
    return %c0_i32, %c0_i32_0 : i32, i32
  }
}

</mosaic_0001>

<llo_original>
// kernel: tile.8
$region0: #{tile.8}
  #allocation0 [shape = 's32[1]{0}', space=sflag, size = 0x4, scoped, tag = 'scoped memory for tile.8']
  %s0 = inlined_call_operand.vmem [shape: f32[8], index: 0, kind: input, shape index: {}]
  %s1 = inlined_call_operand.vmem [shape: f32[8,8], index: 1, kind: output, shape index: {}]
  // Predicated region
  $region2: #{tile.8} parent=0 // pred_check
    _
  $region3: #{tile.8} parent=0 // pred_check_branch
    %3 = sbr.rel (0) target = $region5
  $region4: #{tile.8} parent=0 // pred_region
    _
  $region5: #{tile.8} parent=0 // pred_fallthru
    _
  %v4 = vld [vmem:[%s0] ss:$0 sm:$0xff]
  %5 = vst [vmem:[%s1] sm:$0xff] %v4

// kernel: tile.9
$region0: #{tile.9}
  %s0 = inlined_call_operand.vmem [shape: f32[8,8], index: 0, kind: input, shape index: {}]
  %s1 = inlined_call_operand.vmem [shape: f32[1,64], index: 1, kind: output, shape index: {}]
  $region1: #{tile.9} parent=0
    #allocation0 [shape = 'u8[4096]{0}', space=vmem, size = 0x1000, scoped, tag = 'scoped mem for output reshape']
    %v2 = vld [vmem:[%s0] sm:$0x1]
    %vm3 = vcmask 64512
    %4 = vst.msk [vmem:[#allocation0] sm:$0x1] %vm3, %v2
    %s5 = scalar_lea.vmem %s0, 7
    %v6 = vld [vmem:[%s5] sm:$0x1]
    %7 = vrot.lane.b32.xlu0 %v6, 56
    %v8 = vpop.permute.xlu0 %7
    %vm9 = vcmask 523712
    %10 = vst.msk [vmem:[#allocation0] sm:$0x1] %vm9, %v8
    %s11 = scalar_lea.vmem %s0, 6
    %v12 = vld [vmem:[%s11] sm:$0x1]
    %13 = vrot.lane.b32.xlu0 %v12, 48
    %v14 = vpop.permute.xlu0 %13
    %vm15 = vcmask 458112
    %16 = vst.msk [vmem:[#allocation0] sm:$0x1] %vm15, %v14
    %s17 = scalar_lea.vmem %s0, 5
    %v18 = vld [vmem:[%s17] sm:$0x1]
    %19 = vrot.lane.b32.xlu0 %v18, 40
    %v20 = vpop.permute.xlu0 %19
    %vm21 = vcmask 392512
    %22 = vst.msk [vmem:[#allocation0] sm:$0x1] %vm21, %v20
    %s23 = scalar_lea.vmem %s0, 4
    %v24 = vld [vmem:[%s23] sm:$0x1]
    %25 = vrot.lane.b32.xlu0 %v24, 32
    %v26 = vpop.permute.xlu0 %25
    %vm27 = vcmask 326912
    %28 = vst.msk [vmem:[#allocation0] sm:$0x1] %vm27, %v26
    %s29 = scalar_lea.vmem %s0, 3
    %v30 = vld [vmem:[%s29] sm:$0x1]
    %31 = vrot.lane.b32.xlu0 %v30, 24
    %v32 = vpop.permute.xlu0 %31
    %vm33 = vcmask 261312
    %34 = vst.msk [vmem:[#allocation0] sm:$0x1] %vm33, %v32
    %s35 = scalar_lea.vmem %s0, 2
    %v36 = vld [vmem:[%s35] sm:$0x1]
    %37 = vrot.lane.b32.xlu0 %v36, 16
    %v38 = vpop.permute.xlu0 %37
    %vm39 = vcmask 195712
    %40 = vst.msk [vmem:[#allocation0] sm:$0x1] %vm39, %v38
    %s41 = scalar_lea.vmem %s0, 1
    %v42 = vld [vmem:[%s41] sm:$0x1]
    %43 = vrot.lane.b32.xlu0 %v42, 8
    %v44 = vpop.permute.xlu0 %43
    %vm45 = vcmask 130112
    %46 = vst.msk [vmem:[#allocation0] sm:$0x1] %vm45, %v44
    %s48 = sshllo.u32 0, 1
    %v50 = vld [vmem:[#allocation0] sm:%s48]
    %s51 = sshllo.u32 0, 1
    %52 = vst [vmem:[%s1] sm:%s51] %v50

// kernel: mvcnn_shrec17_forward.1
$region0: #{mvcnn_shrec17_forward.1}
  #allocation0 [shape = 'u32[]', space=smem, size = 0x4, offset = 0x4, fixed_abs, tag = 'smem constant byte address 0x4 - core index']
  #allocation1 [shape = 'u32[144,128]{1,0:T(1,128)}', space=vmem, size = 0x12000, scoped, tag = 'internal scratch']
  %s0 = inlined_call_operand.vmem [shape: f32[192,256], index: 0, kind: input, shape index: {}]
  %s1 = inlined_call_operand.vmem [shape: f32[192,256], index: 1, kind: input, shape index: {}]
  %s2 = inlined_call_operand.vmem [shape: f32[256,64], index: 2, kind: input, shape index: {}]
  %s3 = inlined_call_operand.vmem [shape: f32[256,64], index: 3, kind: input, shape index: {}]
  %s4 = inlined_call_operand.vmem [shape: f32[1,64], index: 4, kind: input, shape index: {}]
  %s5 = inlined_call_operand.vmem [shape: f32[512,64], index: 5, kind: input, shape index: {}]
  %s6 = inlined_call_operand.vmem [shape: f32[1,64], index: 6, kind: input, shape index: {}]
  %s7 = inlined_call_operand.vmem [shape: f32[64,128], index: 7, kind: input, shape index: {}]
  %s8 = inlined_call_operand.vmem [shape: f32[1,128], index: 8, kind: input, shape index: {}]
  %s9 = inlined_call_operand.vmem [shape: f32[128,128], index: 9, kind: input, shape index: {}]
  %s10 = inlined_call_operand.vmem [shape: f32[1,128], index: 10, kind: input, shape index: {}]
  %s11 = inlined_call_operand.vmem [shape: f32[8,128], index: 11, kind: output, shape index: {0}]
  %s12 = inlined_call_operand.vmem [shape: f32[8,128], index: 12, kind: output, shape index: {1}]
  %13 = xla_tuple %s11, %s12
  %s14 = sld [smem:[#allocation0]]
  $region62: #{mvcnn_shrec17_forward.1} parent=0
    _
  %s16 = ssub.s32 1, %s14
  %s17 = scalar_select 0, %s16, %s14
  // Predicated region
  $region2: #{mvcnn_shrec17_forward.1} parent=0 // pred_check
    _
  $region3: #{mvcnn_shrec17_forward.1} parent=0 // pred_check_branch
    %19 = sbr.rel (0) target = $region5
  $region4: #{mvcnn_shrec17_forward.1} parent=0 // pred_region
    _
  $region5: #{mvcnn_shrec17_forward.1} parent=0 // pred_fallthru
    _
  // Predicated region
  $region6: #{mvcnn_shrec17_forward.1} parent=0 // pred_check
    _
  $region7: #{mvcnn_shrec17_forward.1} parent=0 // pred_check_branch
    %21 = sbr.rel (0) target = $region9
  $region8: #{mvcnn_shrec17_forward.1} parent=0 // pred_region
    _
  $region9: #{mvcnn_shrec17_forward.1} parent=0 // pred_fallthru
    _
  // Predicated region
  $region10: #{mvcnn_shrec17_forward.1} parent=0 // pred_check
    _
  $region11: #{mvcnn_shrec17_forward.1} parent=0 // pred_check_branch
    %23 = sbr.rel (0) target = $region13
  $region12: #{mvcnn_shrec17_forward.1} parent=0 // pred_region
    _
  $region13: #{mvcnn_shrec17_forward.1} parent=0 // pred_fallthru
    _
  // Predicated region
  $region14: #{mvcnn_shrec17_forward.1} parent=0 // pred_check
    _
  $region15: #{mvcnn_shrec17_forward.1} parent=0 // pred_check_branch
    %25 = sbr.rel (0) target = $region17
  $region16: #{mvcnn_shrec17_forward.1} parent=0 // pred_region
    _
  $region17: #{mvcnn_shrec17_forward.1} parent=0 // pred_fallthru
    _
  // Predicated region
  $region18: #{mvcnn_shrec17_forward.1} parent=0 // pred_check
    _
  $region19: #{mvcnn_shrec17_forward.1} parent=0 // pred_check_branch
    %27 = sbr.rel (0) target = $region21
  $region20: #{mvcnn_shrec17_forward.1} parent=0 // pred_region
    _
  $region21: #{mvcnn_shrec17_forward.1} parent=0 // pred_fallthru
    _
  // Predicated region
  $region22: #{mvcnn_shrec17_forward.1} parent=0 // pred_check
    _
  $region23: #{mvcnn_shrec17_forward.1} parent=0 // pred_check_branch
    %29 = sbr.rel (0) target = $region25
  $region24: #{mvcnn_shrec17_forward.1} parent=0 // pred_region
    _
  $region25: #{mvcnn_shrec17_forward.1} parent=0 // pred_fallthru
    _
  // Predicated region
  $region26: #{mvcnn_shrec17_forward.1} parent=0 // pred_check
    _
  $region27: #{mvcnn_shrec17_forward.1} parent=0 // pred_check_branch
    %31 = sbr.rel (0) target = $region29
  $region28: #{mvcnn_shrec17_forward.1} parent=0 // pred_region
    _
  $region29: #{mvcnn_shrec17_forward.1} parent=0 // pred_fallthru
    _
  // Predicated region
  $region30: #{mvcnn_shrec17_forward.1} parent=0 // pred_check
    _
  $region31: #{mvcnn_shrec17_forward.1} parent=0 // pred_check_branch
    %33 = sbr.rel (0) target = $region33
  $region32: #{mvcnn_shrec17_forward.1} parent=0 // pred_region
    _
  $region33: #{mvcnn_shrec17_forward.1} parent=0 // pred_fallthru
    _
  // Predicated region
  $region34: #{mvcnn_shrec17_forward.1} parent=0 // pred_check
    _
  $region35: #{mvcnn_shrec17_forward.1} parent=0 // pred_check_branch
    %35 = sbr.rel (0) target = $region37
  $region36: #{mvcnn_shrec17_forward.1} parent=0 // pred_region
    _
  $region37: #{mvcnn_shrec17_forward.1} parent=0 // pred_fallthru
    _
  // Predicated region
  $region38: #{mvcnn_shrec17_forward.1} parent=0 // pred_check
    _
  $region39: #{mvcnn_shrec17_forward.1} parent=0 // pred_check_branch
    %37 = sbr.rel (0) target = $region41
  $region40: #{mvcnn_shrec17_forward.1} parent=0 // pred_region
    _
  $region41: #{mvcnn_shrec17_forward.1} parent=0 // pred_fallthru
    _
  // Predicated region
  $region42: #{mvcnn_shrec17_forward.1} parent=0 // pred_check
    _
  $region43: #{mvcnn_shrec17_forward.1} parent=0 // pred_check_branch
    %39 = sbr.rel (0) target = $region45
  $region44: #{mvcnn_shrec17_forward.1} parent=0 // pred_region
    _
  $region45: #{mvcnn_shrec17_forward.1} parent=0 // pred_fallthru
    _
  %v40 = vld [vmem:[%s0] sm:$0xff]
  %v41 = vld [vmem:[%s0 + $0x8] sm:$0xff]
  %v42 = vld [vmem:[%s0 + $0x10] sm:$0xff]
  %v43 = vld [vmem:[%s0 + $0x18] sm:$0xff]
  %v44 = vld [vmem:[%s0 + $0x20] sm:$0xff]
  %v45 = vld [vmem:[%s0 + $0x28] sm:$0xff]
  %v46 = vld [vmem:[%s0 + $0x30] sm:$0xff]
  %v47 = vld [vmem:[%s0 + $0x38] sm:$0xff]
  %v48 = vld [vmem:[%s0 + $0x40] sm:$0xff]
  %v49 = vld [vmem:[%s0 + $0x48] sm:$0xff]
  %v50 = vld [vmem:[%s0 + $0x50] sm:$0xff]
  %v51 = vld [vmem:[%s0 + $0x58] sm:$0xff]
  %v52 = vld [vmem:[%s0 + $0x60] sm:$0xff]
  %v53 = vld [vmem:[%s0 + $0x68] sm:$0xff]
  %v54 = vld [vmem:[%s0 + $0x70] sm:$0xff]
  %v55 = vld [vmem:[%s0 + $0x78] sm:$0xff]
  %v56 = vld [vmem:[%s0 + $0x80] sm:$0xff]
  %v57 = vld [vmem:[%s0 + $0x88] sm:$0xff]
  %v58 = vld [vmem:[%s0 + $0x90] sm:$0xff]
  %v59 = vld [vmem:[%s0 + $0x98] sm:$0xff]
  %v60 = vld [vmem:[%s0 + $0xa0] sm:$0xff]
  %v61 = vld [vmem:[%s0 + $0xa8] sm:$0xff]
  %v62 = vld [vmem:[%s0 + $0xb0] sm:$0xff]
  %v63 = vld [vmem:[%s0 + $0xb8] sm:$0xff]
  %v64 = vld [vmem:[%s0 + $0xc0] sm:$0xff]
  %v65 = vld [vmem:[%s0 + $0xc8] sm:$0xff]
  %v66 = vld [vmem:[%s0 + $0xd0] sm:$0xff]
  %v67 = vld [vmem:[%s0 + $0xd8] sm:$0xff]
  %v68 = vld [vmem:[%s0 + $0xe0] sm:$0xff]
  %v69 = vld [vmem:[%s0 + $0xe8] sm:$0xff]
  %v70 = vld [vmem:[%s0 + $0xf0] sm:$0xff]
  %v71 = vld [vmem:[%s0 + $0xf8] sm:$0xff]
  %v72 = vld [vmem:[%s0 + $0x100] sm:$0xff]
  %v73 = vld [vmem:[%s0 + $0x108] sm:$0xff]
  %v74 = vld [vmem:[%s0 + $0x110] sm:$0xff]
  %v75 = vld [vmem:[%s0 + $0x118] sm:$0xff]
  %v76 = vld [vmem:[%s0 + $0x120] sm:$0xff]
  %v77 = vld [vmem:[%s0 + $0x128] sm:$0xff]
  %v78 = vld [vmem:[%s0 + $0x130] sm:$0xff]
  %v79 = vld [vmem:[%s0 + $0x138] sm:$0xff]
  %v80 = vld [vmem:[%s0 + $0x140] sm:$0xff]
  %v81 = vld [vmem:[%s0 + $0x148] sm:$0xff]
  %v82 = vld [vmem:[%s0 + $0x150] sm:$0xff]
  %v83 = vld [vmem:[%s0 + $0x158] sm:$0xff]
  %v84 = vld [vmem:[%s0 + $0x160] sm:$0xff]
  %v85 = vld [vmem:[%s0 + $0x168] sm:$0xff]
  %v86 = vld [vmem:[%s0 + $0x170] sm:$0xff]
  %v87 = vld [vmem:[%s0 + $0x178] sm:$0xff]
  %v88 = vld [vmem:[%s1] sm:$0xff]
  %v89 = vld [vmem:[%s1 + $0x8] sm:$0xff]
  %v90 = vld [vmem:[%s1 + $0x10] sm:$0xff]
  %v91 = vld [vmem:[%s1 + $0x18] sm:$0xff]
  %v92 = vld [vmem:[%s1 + $0x20] sm:$0xff]
  %v93 = vld [vmem:[%s1 + $0x28] sm:$0xff]
  %v94 = vld [vmem:[%s1 + $0x30] sm:$0xff]
  %v95 = vld [vmem:[%s1 + $0x38] sm:$0xff]
  %v96 = vld [vmem:[%s1 + $0x40] sm:$0xff]
  %v97 = vld [vmem:[%s1 + $0x48] sm:$0xff]
  %v98 = vld [vmem:[%s1 + $0x50] sm:$0xff]
  %v99 = vld [vmem:[%s1 + $0x58] sm:$0xff]
  %v100 = vld [vmem:[%s1 + $0x60] sm:$0xff]
  %v101 = vld [vmem:[%s1 + $0x68] sm:$0xff]
  %v102 = vld [vmem:[%s1 + $0x70] sm:$0xff]
  %v103 = vld [vmem:[%s1 + $0x78] sm:$0xff]
  %v104 = vld [vmem:[%s1 + $0x80] sm:$0xff]
  %v105 = vld [vmem:[%s1 + $0x88] sm:$0xff]
  %v106 = vld [vmem:[%s1 + $0x90] sm:$0xff]
  %v107 = vld [vmem:[%s1 + $0x98] sm:$0xff]
  %v108 = vld [vmem:[%s1 + $0xa0] sm:$0xff]
  %v109 = vld [vmem:[%s1 + $0xa8] sm:$0xff]
  %v110 = vld [vmem:[%s1 + $0xb0] sm:$0xff]
  %v111 = vld [vmem:[%s1 + $0xb8] sm:$0xff]
  %v112 = vld [vmem:[%s1 + $0xc0] sm:$0xff]
  %v113 = vld [vmem:[%s1 + $0xc8] sm:$0xff]
  %v114 = vld [vmem:[%s1 + $0xd0] sm:$0xff]
  %v115 = vld [vmem:[%s1 + $0xd8] sm:$0xff]
  %v116 = vld [vmem:[%s1 + $0xe0] sm:$0xff]
  %v117 = vld [vmem:[%s1 + $0xe8] sm:$0xff]
  %v118 = vld [vmem:[%s1 + $0xf0] sm:$0xff]
  %v119 = vld [vmem:[%s1 + $0xf8] sm:$0xff]
  %v120 = vld [vmem:[%s1 + $0x100] sm:$0xff]
  %v121 = vld [vmem:[%s1 + $0x108] sm:$0xff]
  %v122 = vld [vmem:[%s1 + $0x110] sm:$0xff]
  %v123 = vld [vmem:[%s1 + $0x118] sm:$0xff]
  %v124 = vld [vmem:[%s1 + $0x120] sm:$0xff]
  %v125 = vld [vmem:[%s1 + $0x128] sm:$0xff]
  %v126 = vld [vmem:[%s1 + $0x130] sm:$0xff]
  %v127 = vld [vmem:[%s1 + $0x138] sm:$0xff]
  %v128 = vld [vmem:[%s1 + $0x140] sm:$0xff]
  %v129 = vld [vmem:[%s1 + $0x148] sm:$0xff]
  %v130 = vld [vmem:[%s1 + $0x150] sm:$0xff]
  %v131 = vld [vmem:[%s1 + $0x158] sm:$0xff]
  %v132 = vld [vmem:[%s1 + $0x160] sm:$0xff]
  %v133 = vld [vmem:[%s1 + $0x168] sm:$0xff]
  %v134 = vld [vmem:[%s1 + $0x170] sm:$0xff]
  %v135 = vld [vmem:[%s1 + $0x178] sm:$0xff]
  %v136 = vld [vmem:[%s2] sm:$0xff]
  %v137 = vld [vmem:[%s2 + $0x8] sm:$0xff]
  %v138 = vld [vmem:[%s2 + $0x10] sm:$0xff]
  %v139 = vld [vmem:[%s2 + $0x18] sm:$0xff]
  %v140 = vld [vmem:[%s2 + $0x20] sm:$0xff]
  %v141 = vld [vmem:[%s2 + $0x28] sm:$0xff]
  %v142 = vld [vmem:[%s2 + $0x30] sm:$0xff]
  %v143 = vld [vmem:[%s2 + $0x38] sm:$0xff]
  %v144 = vld [vmem:[%s2 + $0x40] sm:$0xff]
  %v145 = vld [vmem:[%s2 + $0x48] sm:$0xff]
  %v146 = vld [vmem:[%s2 + $0x50] sm:$0xff]
  %v147 = vld [vmem:[%s2 + $0x58] sm:$0xff]
  %v148 = vld [vmem:[%s2 + $0x60] sm:$0xff]
  %v149 = vld [vmem:[%s2 + $0x68] sm:$0xff]
  %v150 = vld [vmem:[%s2 + $0x70] sm:$0xff]
  %v151 = vld [vmem:[%s2 + $0x78] sm:$0xff]
  %v152 = vld [vmem:[%s2 + $0x80] sm:$0xff]
  %v153 = vld [vmem:[%s2 + $0x88] sm:$0xff]
  %v154 = vld [vmem:[%s2 + $0x90] sm:$0xff]
  %v155 = vld [vmem:[%s2 + $0x98] sm:$0xff]
  %v156 = vld [vmem:[%s2 + $0xa0] sm:$0xff]
  %v157 = vld [vmem:[%s2 + $0xa8] sm:$0xff]
  %v158 = vld [vmem:[%s2 + $0xb0] sm:$0xff]
  %v159 = vld [vmem:[%s2 + $0xb8] sm:$0xff]
  %v160 = vld [vmem:[%s2 + $0xc0] sm:$0xff]
  %v161 = vld [vmem:[%s2 + $0xc8] sm:$0xff]
  %v162 = vld [vmem:[%s2 + $0xd0] sm:$0xff]
  %v163 = vld [vmem:[%s2 + $0xd8] sm:$0xff]
  %v164 = vld [vmem:[%s2 + $0xe0] sm:$0xff]
  %v165 = vld [vmem:[%s2 + $0xe8] sm:$0xff]
  %v166 = vld [vmem:[%s2 + $0xf0] sm:$0xff]
  %v167 = vld [vmem:[%s2 + $0xf8] sm:$0xff]
  %v168 = vld [vmem:[%s3] sm:$0xff]
  %v169 = vld [vmem:[%s3 + $0x8] sm:$0xff]
  %v170 = vld [vmem:[%s3 + $0x10] sm:$0xff]
  %v171 = vld [vmem:[%s3 + $0x18] sm:$0xff]
  %v172 = vld [vmem:[%s3 + $0x20] sm:$0xff]
  %v173 = vld [vmem:[%s3 + $0x28] sm:$0xff]
  %v174 = vld [vmem:[%s3 + $0x30] sm:$0xff]
  %v175 = vld [vmem:[%s3 + $0x38] sm:$0xff]
  %v176 = vld [vmem:[%s3 + $0x40] sm:$0xff]
  %v177 = vld [vmem:[%s3 + $0x48] sm:$0xff]
  %v178 = vld [vmem:[%s3 + $0x50] sm:$0xff]
  %v179 = vld [vmem:[%s3 + $0x58] sm:$0xff]
  %v180 = vld [vmem:[%s3 + $0x60] sm:$0xff]
  %v181 = vld [vmem:[%s3 + $0x68] sm:$0xff]
  %v182 = vld [vmem:[%s3 + $0x70] sm:$0xff]
  %v183 = vld [vmem:[%s3 + $0x78] sm:$0xff]
  %v184 = vld [vmem:[%s3 + $0x80] sm:$0xff]
  %v185 = vld [vmem:[%s3 + $0x88] sm:$0xff]
  %v186 = vld [vmem:[%s3 + $0x90] sm:$0xff]
  %v187 = vld [vmem:[%s3 + $0x98] sm:$0xff]
  %v188 = vld [vmem:[%s3 + $0xa0] sm:$0xff]
  %v189 = vld [vmem:[%s3 + $0xa8] sm:$0xff]
  %v190 = vld [vmem:[%s3 + $0xb0] sm:$0xff]
  %v191 = vld [vmem:[%s3 + $0xb8] sm:$0xff]
  %v192 = vld [vmem:[%s3 + $0xc0] sm:$0xff]
  %v193 = vld [vmem:[%s3 + $0xc8] sm:$0xff]
  %v194 = vld [vmem:[%s3 + $0xd0] sm:$0xff]
  %v195 = vld [vmem:[%s3 + $0xd8] sm:$0xff]
  %v196 = vld [vmem:[%s3 + $0xe0] sm:$0xff]
  %v197 = vld [vmem:[%s3 + $0xe8] sm:$0xff]
  %v198 = vld [vmem:[%s3 + $0xf0] sm:$0xff]
  %v199 = vld [vmem:[%s3 + $0xf8] sm:$0xff]
  %200 = vmatprep.subr.mxu0 0.0
  %201 = vmatpush1.msra.mxu0 %v136
  %202 = vmatprep.subr.mxu0 0.0
  %203 = vmatpush1.msra.mxu0 %v137
  %204 = vmatprep.subr.mxu0 0.0
  %205 = vmatpush1.msra.mxu0 %v138
  %206 = vmatprep.subr.mxu0 0.0
  %207 = vmatpush1.msra.mxu0 %v139
  %208 = vmatprep.subr.mxu0 0.0
  %209 = vmatpush1.msra.mxu0 %v140
  %210 = vmatprep.subr.mxu0 0.0
  %211 = vmatpush1.msra.mxu0 %v141
  %212 = vmatprep.subr.mxu0 0.0
  %213 = vmatpush1.msra.mxu0 %v142
  %214 = vmatprep.subr.mxu0 0.0
  %215 = vmatpush1.msra.mxu0 %v143
  %216 = vmatprep.subr.mxu0 0.0
  %217 = vmatpush1.msra.mxu0 %v144
  %218 = vmatprep.subr.mxu0 0.0
  %219 = vmatpush1.msra.mxu0 %v145
  %220 = vmatprep.subr.mxu0 0.0
  %221 = vmatpush1.msra.mxu0 %v146
  %222 = vmatprep.subr.mxu0 0.0
  %223 = vmatpush1.msra.mxu0 %v147
  %224 = vmatprep.subr.mxu0 0.0
  %225 = vmatpush1.msra.mxu0 %v148
  %226 = vmatprep.subr.mxu0 0.0
  %227 = vmatpush1.msra.mxu0 %v149
  %228 = vmatprep.subr.mxu0 0.0
  %229 = vmatpush1.msra.mxu0 %v150
  %230 = vmatprep.subr.mxu0 0.0
  %231 = vmatpush1.msra.mxu0 %v151
  %232 = vmatprep.subr.mxu0 0.0
  %233 = vmatpush1.msra.mxu0 %v152
  %234 = vmatprep.subr.mxu0 0.0
  %235 = vmatpush1.msra.mxu0 %v153
  %236 = vmatprep.subr.mxu0 0.0
  %237 = vmatpush1.msra.mxu0 %v154
  %238 = vmatprep.subr.mxu0 0.0
  %239 = vmatpush1.msra.mxu0 %v155
  %240 = vmatprep.subr.mxu0 0.0
  %241 = vmatpush1.msra.mxu0 %v156
  %242 = vmatprep.subr.mxu0 0.0
  %243 = vmatpush1.msra.mxu0 %v157
  %244 = vmatprep.subr.mxu0 0.0
  %245 = vmatpush1.msra.mxu0 %v158
  %246 = vmatprep.subr.mxu0 0.0
  %247 = vmatpush1.msra.mxu0 %v159
  %248 = vmatprep.subr.mxu0 0.0
  %249 = vmatpush1.msra.mxu0 %v160
  %250 = vmatprep.subr.mxu0 0.0
  %251 = vmatpush1.msra.mxu0 %v161
  %252 = vmatprep.subr.mxu0 0.0
  %253 = vmatpush1.msra.mxu0 %v162
  %254 = vmatprep.subr.mxu0 0.0
  %255 = vmatpush1.msra.mxu0 %v163
  %256 = vmatprep.subr.mxu0 0.0
  %257 = vmatpush1.msra.mxu0 %v164
  %258 = vmatprep.subr.mxu0 0.0
  %259 = vmatpush1.msra.mxu0 %v165
  %260 = vmatprep.subr.mxu0 0.0
  %261 = vmatpush1.msra.mxu0 %v166
  %262 = vmatprep.subr.mxu0 0.0
  %263 = vmatpush1.msra.mxu0 %v167
  %264 = vmatprep.mubr.f32.mxu0 %v41
  %265 = vmatmul.mubr.f32.gmra.mrb[0].mxu0 %v40
  %v266 = vpop.f32.mrb[0].mxu0
  %v267 = vadd.f32 0.0, %v266
  %v268 = vpop.f32.mrb[0].mxu0
  %269 = vmatprep.mubr.f32.mxu0 %v43
  %270 = vmatmul.mubr.f32.gmra.mrb[0].mxu0 %v42
  %v271 = vpop.f32.mrb[0].mxu0
  %v272 = vadd.f32 0.0, %v271
  %v273 = vpop.f32.mrb[0].mxu0
  %274 = vmatprep.mubr.f32.mxu0 %v45
  %275 = vmatmul.mubr.f32.gmra.mrb[0].mxu0 %v44
  %v276 = vpop.f32.mrb[0].mxu0
  %v277 = vadd.f32 0.0, %v276
  %v278 = vpop.f32.mrb[0].mxu0
  %279 = vmatprep.mubr.f32.mxu0 %v47
  %280 = vmatmul.mubr.f32.gmra.mrb[0].mxu0 %v46
  %v281 = vpop.f32.mrb[0].mxu0
  %v282 = vadd.f32 0.0, %v281
  %v283 = vpop.f32.mrb[0].mxu0
  %284 = vmatprep.mubr.f32.mxu0 %v49
  %285 = vmatmul.mubr.f32.gmra.mrb[0].mxu0 %v48
  %v286 = vpop.f32.mrb[0].mxu0
  %v287 = vadd.f32 0.0, %v286
  %v288 = vpop.f32.mrb[0].mxu0
  %289 = vmatprep.mubr.f32.mxu0 %v51
  %290 = vmatmul.mubr.f32.gmra.mrb[0].mxu0 %v50
  %v291 = vpop.f32.mrb[0].mxu0
  %v292 = vadd.f32 0.0, %v291
  %v293 = vpop.f32.mrb[0].mxu0
  %294 = vmatprep.mubr.f32.mxu0 %v53
  %295 = vmatmul.mubr.f32.gmra.mrb[0].mxu0 %v52
  %v296 = vpop.f32.mrb[0].mxu0
  %v297 = vadd.f32 0.0, %v296
  %v298 = vpop.f32.mrb[0].mxu0
  %299 = vmatprep.mubr.f32.mxu0 %v55
  %300 = vmatmul.mubr.f32.gmra.mrb[0].mxu0 %v54
  %v301 = vpop.f32.mrb[0].mxu0
  %v302 = vadd.f32 0.0, %v301
  %v303 = vpop.f32.mrb[0].mxu0
  %304 = vmatprep.mubr.f32.mxu0 %v57
  %305 = vmatmul.mubr.f32.gmra.mrb[0].mxu0 %v56
  %v306 = vpop.f32.mrb[0].mxu0
  %v307 = vadd.f32 0.0, %v306
  %v308 = vpop.f32.mrb[0].mxu0
  %309 = vmatprep.mubr.f32.mxu0 %v59
  %310 = vmatmul.mubr.f32.gmra.mrb[0].mxu0 %v58
  %v311 = vpop.f32.mrb[0].mxu0
  %v312 = vadd.f32 0.0, %v311
  %v313 = vpop.f32.mrb[0].mxu0
  %314 = vmatprep.mubr.f32.mxu0 %v61
  %315 = vmatmul.mubr.f32.gmra.mrb[0].mxu0 %v60
  %v316 = vpop.f32.mrb[0].mxu0
  %v317 = vadd.f32 0.0, %v316
  %v318 = vpop.f32.mrb[0].mxu0
  %319 = vmatprep.mubr.f32.mxu0 %v63
  %320 = vmatmul.mubr.f32.gmra.mrb[0].mxu0 %v62
  %v321 = vpop.f32.mrb[0].mxu0
  %v322 = vadd.f32 0.0, %v321
  %v323 = vpop.f32.mrb[0].mxu0
  %324 = vmatprep.mubr.f32.mxu0 %v65
  %325 = vmatmul.mubr.f32.gmra.mrb[0].mxu0 %v64
  %v326 = vpop.f32.mrb[0].mxu0
  %v327 = vadd.f32 0.0, %v326
  %v328 = vpop.f32.mrb[0].mxu0
  %329 = vmatprep.mubr.f32.mxu0 %v67
  %330 = vmatmul.mubr.f32.gmra.mrb[0].mxu0 %v66
  %v331 = vpop.f32.mrb[0].mxu0
  %v332 = vadd.f32 0.0, %v331
  %v333 = vpop.f32.mrb[0].mxu0
  %334 = vmatprep.mubr.f32.mxu0 %v69
  %335 = vmatmul.mubr.f32.gmra.mrb[0].mxu0 %v68
  %v336 = vpop.f32.mrb[0].mxu0
  %v337 = vadd.f32 0.0, %v336
  %v338 = vpop.f32.mrb[0].mxu0
  %339 = vmatprep.mubr.f32.mxu0 %v71
  %340 = vmatmul.mubr.f32.gmra.mrb[0].mxu0 %v70
  %v341 = vpop.f32.mrb[0].mxu0
  %v342 = vadd.f32 0.0, %v341
  %v343 = vpop.f32.mrb[0].mxu0
  %344 = vmatprep.mubr.f32.mxu0 %v73
  %345 = vmatmul.mubr.f32.gmra.mrb[0].mxu0 %v72
  %v346 = vpop.f32.mrb[0].mxu0
  %v347 = vadd.f32 0.0, %v346
  %v348 = vpop.f32.mrb[0].mxu0
  %349 = vmatprep.mubr.f32.mxu0 %v75
  %350 = vmatmul.mubr.f32.gmra.mrb[0].mxu0 %v74
  %v351 = vpop.f32.mrb[0].mxu0
  %v352 = vadd.f32 0.0, %v351
  %v353 = vpop.f32.mrb[0].mxu0
  %354 = vmatprep.mubr.f32.mxu0 %v77
  %355 = vmatmul.mubr.f32.gmra.mrb[0].mxu0 %v76
  %v356 = vpop.f32.mrb[0].mxu0
  %v357 = vadd.f32 0.0, %v356
  %v358 = vpop.f32.mrb[0].mxu0
  %359 = vmatprep.mubr.f32.mxu0 %v79
  %360 = vmatmul.mubr.f32.gmra.mrb[0].mxu0 %v78
  %v361 = vpop.f32.mrb[0].mxu0
  %v362 = vadd.f32 0.0, %v361
  %v363 = vpop.f32.mrb[0].mxu0
  %364 = vmatprep.mubr.f32.mxu0 %v81
  %365 = vmatmul.mubr.f32.gmra.mrb[0].mxu0 %v80
  %v366 = vpop.f32.mrb[0].mxu0
  %v367 = vadd.f32 0.0, %v366
  %v368 = vpop.f32.mrb[0].mxu0
  %369 = vmatprep.mubr.f32.mxu0 %v83
  %370 = vmatmul.mubr.f32.gmra.mrb[0].mxu0 %v82
  %v371 = vpop.f32.mrb[0].mxu0
  %v372 = vadd.f32 0.0, %v371
  %v373 = vpop.f32.mrb[0].mxu0
  %374 = vmatprep.mubr.f32.mxu0 %v85
  %375 = vmatmul.mubr.f32.gmra.mrb[0].mxu0 %v84
  %v376 = vpop.f32.mrb[0].mxu0
  %v377 = vadd.f32 0.0, %v376
  %v378 = vpop.f32.mrb[0].mxu0
  %379 = vmatprep.mubr.f32.mxu0 %v87
  %380 = vmatmul.mubr.f32.gmra.mrb[0].mxu0 %v86
  %v381 = vpop.f32.mrb[0].mxu0
  %v382 = vadd.f32 0.0, %v381
  %v383 = vpop.f32.mrb[0].mxu0
  %384 = vdwg.mxu0
  %385 = vmatprep.subr.mxu0 0.0
  %386 = vmatpush1.msra.mxu0 %v168
  %387 = vmatprep.subr.mxu0 0.0
  %388 = vmatpush1.msra.mxu0 %v169
  %389 = vmatprep.subr.mxu0 0.0
  %390 = vmatpush1.msra.mxu0 %v170
  %391 = vmatprep.subr.mxu0 0.0
  %392 = vmatpush1.msra.mxu0 %v171
  %393 = vmatprep.subr.mxu0 0.0
  %394 = vmatpush1.msra.mxu0 %v172
  %395 = vmatprep.subr.mxu0 0.0
  %396 = vmatpush1.msra.mxu0 %v173
  %397 = vmatprep.subr.mxu0 0.0
  %398 = vmatpush1.msra.mxu0 %v174
  %399 = vmatprep.subr.mxu0 0.0
  %400 = vmatpush1.msra.mxu0 %v175
  %401 = vmatprep.subr.mxu0 0.0
  %402 = vmatpush1.msra.mxu0 %v176
  %403 = vmatprep.subr.mxu0 0.0
  %404 = vmatpush1.msra.mxu0 %v177
  %405 = vmatprep.subr.mxu0 0.0
  %406 = vmatpush1.msra.mxu0 %v178
  %407 = vmatprep.subr.mxu0 0.0
  %408 = vmatpush1.msra.mxu0 %v179
  %409 = vmatprep.subr.mxu0 0.0
  %410 = vmatpush1.msra.mxu0 %v180
  %411 = vmatprep.subr.mxu0 0.0
  %412 = vmatpush1.msra.mxu0 %v181
  %413 = vmatprep.subr.mxu0 0.0
  %414 = vmatpush1.msra.mxu0 %v182
  %415 = vmatprep.subr.mxu0 0.0
  %416 = vmatpush1.msra.mxu0 %v183
  %417 = vmatprep.subr.mxu0 0.0
  %418 = vmatpush1.msra.mxu0 %v184
  %419 = vmatprep.subr.mxu0 0.0
  %420 = vmatpush1.msra.mxu0 %v185
  %421 = vmatprep.subr.mxu0 0.0
  %422 = vmatpush1.msra.mxu0 %v186
  %423 = vmatprep.subr.mxu0 0.0
  %424 = vmatpush1.msra.mxu0 %v187
  %425 = vmatprep.subr.mxu0 0.0
  %426 = vmatpush1.msra.mxu0 %v188
  %427 = vmatprep.subr.mxu0 0.0
  %428 = vmatpush1.msra.mxu0 %v189
  %429 = vmatprep.subr.mxu0 0.0
  %430 = vmatpush1.msra.mxu0 %v190
  %431 = vmatprep.subr.mxu0 0.0
  %432 = vmatpush1.msra.mxu0 %v191
  %433 = vmatprep.subr.mxu0 0.0
  %434 = vmatpush1.msra.mxu0 %v192
  %435 = vmatprep.subr.mxu0 0.0
  %436 = vmatpush1.msra.mxu0 %v193
  %437 = vmatprep.subr.mxu0 0.0
  %438 = vmatpush1.msra.mxu0 %v194
  %439 = vmatprep.subr.mxu0 0.0
  %440 = vmatpush1.msra.mxu0 %v195
  %441 = vmatprep.subr.mxu0 0.0
  %442 = vmatpush1.msra.mxu0 %v196
  %443 = vmatprep.subr.mxu0 0.0
  %444 = vmatpush1.msra.mxu0 %v197
  %445 = vmatprep.subr.mxu0 0.0
  %446 = vmatpush1.msra.mxu0 %v198
  %447 = vmatprep.subr.mxu0 0.0
  %448 = vmatpush1.msra.mxu0 %v199
  %449 = vmatprep.mubr.f32.mxu0 %v41
  %450 = vmatmul.mubr.f32.gmra.mrb[0].mxu0 %v40
  %v451 = vpop.f32.mrb[0].mxu0
  %v452 = vadd.f32 0.0, %v451
  %v453 = vpop.f32.mrb[0].mxu0
  %454 = vmatprep.mubr.f32.mxu0 %v43
  %455 = vmatmul.mubr.f32.gmra.mrb[0].mxu0 %v42
  %v456 = vpop.f32.mrb[0].mxu0
  %v457 = vadd.f32 0.0, %v456
  %v458 = vpop.f32.mrb[0].mxu0
  %459 = vmatprep.mubr.f32.mxu0 %v45
  %460 = vmatmul.mubr.f32.gmra.mrb[0].mxu0 %v44
  %v461 = vpop.f32.mrb[0].mxu0
  %v462 = vadd.f32 0.0, %v461
  %v463 = vpop.f32.mrb[0].mxu0
  %464 = vmatprep.mubr.f32.mxu0 %v47
  %465 = vmatmul.mubr.f32.gmra.mrb[0].mxu0 %v46
  %v466 = vpop.f32.mrb[0].mxu0
  %v467 = vadd.f32 0.0, %v466
  %v468 = vpop.f32.mrb[0].mxu0
  %469 = vmatprep.mubr.f32.mxu0 %v49
  %470 = vmatmul.mubr.f32.gmra.mrb[0].mxu0 %v48
  %v471 = vpop.f32.mrb[0].mxu0
  %v472 = vadd.f32 0.0, %v471
  %v473 = vpop.f32.mrb[0].mxu0
  %474 = vmatprep.mubr.f32.mxu0 %v51
  %475 = vmatmul.mubr.f32.gmra.mrb[0].mxu0 %v50
  %v476 = vpop.f32.mrb[0].mxu0
  %v477 = vadd.f32 0.0, %v476
  %v478 = vpop.f32.mrb[0].mxu0
  %479 = vmatprep.mubr.f32.mxu0 %v53
  %480 = vmatmul.mubr.f32.gmra.mrb[0].mxu0 %v52
  %v481 = vpop.f32.mrb[0].mxu0
  %v482 = vadd.f32 0.0, %v481
  %v483 = vpop.f32.mrb[0].mxu0
  %484 = vmatprep.mubr.f32.mxu0 %v55
  %485 = vmatmul.mubr.f32.gmra.mrb[0].mxu0 %v54
  %v486 = vpop.f32.mrb[0].mxu0
  %v487 = vadd.f32 0.0, %v486
  %v488 = vpop.f32.mrb[0].mxu0
  %489 = vmatprep.mubr.f32.mxu0 %v57
  %490 = vmatmul.mubr.f32.gmra.mrb[0].mxu0 %v56
  %v491 = vpop.f32.mrb[0].mxu0
  %v492 = vadd.f32 0.0, %v491
  %v493 = vpop.f32.mrb[0].mxu0
  %494 = vmatprep.mubr.f32.mxu0 %v59
  %495 = vmatmul.mubr.f32.gmra.mrb[0].mxu0 %v58
  %v496 = vpop.f32.mrb[0].mxu0
  %v497 = vadd.f32 0.0, %v496
  %v498 = vpop.f32.mrb[0].mxu0
  %499 = vmatprep.mubr.f32.mxu0 %v61
  %500 = vmatmul.mubr.f32.gmra.mrb[0].mxu0 %v60
  %v501 = vpop.f32.mrb[0].mxu0
  %v502 = vadd.f32 0.0, %v501
  %v503 = vpop.f32.mrb[0].mxu0
  %504 = vmatprep.mubr.f32.mxu0 %v63
  %505 = vmatmul.mubr.f32.gmra.mrb[0].mxu0 %v62
  %v506 = vpop.f32.mrb[0].mxu0
  %v507 = vadd.f32 0.0, %v506
  %v508 = vpop.f32.mrb[0].mxu0
  %509 = vmatprep.mubr.f32.mxu0 %v65
  %510 = vmatmul.mubr.f32.gmra.mrb[0].mxu0 %v64
  %v511 = vpop.f32.mrb[0].mxu0
  %v512 = vadd.f32 0.0, %v511
  %v513 = vpop.f32.mrb[0].mxu0
  %514 = vmatprep.mubr.f32.mxu0 %v67
  %515 = vmatmul.mubr.f32.gmra.mrb[0].mxu0 %v66
  %v516 = vpop.f32.mrb[0].mxu0
  %v517 = vadd.f32 0.0, %v516
  %v518 = vpop.f32.mrb[0].mxu0
  %519 = vmatprep.mubr.f32.mxu0 %v69
  %520 = vmatmul.mubr.f32.gmra.mrb[0].mxu0 %v68
  %v521 = vpop.f32.mrb[0].mxu0
  %v522 = vadd.f32 0.0, %v521
  %v523 = vpop.f32.mrb[0].mxu0
  %524 = vmatprep.mubr.f32.mxu0 %v71
  %525 = vmatmul.mubr.f32.gmra.mrb[0].mxu0 %v70
  %v526 = vpop.f32.mrb[0].mxu0
  %v527 = vadd.f32 0.0, %v526
  %v528 = vpop.f32.mrb[0].mxu0
  %529 = vmatprep.mubr.f32.mxu0 %v73
  %530 = vmatmul.mubr.f32.gmra.mrb[0].mxu0 %v72
  %v531 = vpop.f32.mrb[0].mxu0
  %v532 = vadd.f32 0.0, %v531
  %v533 = vpop.f32.mrb[0].mxu0
  %534 = vmatprep.mubr.f32.mxu0 %v75
  %535 = vmatmul.mubr.f32.gmra.mrb[0].mxu0 %v74
  %v536 = vpop.f32.mrb[0].mxu0
  %v537 = vadd.f32 0.0, %v536
  %v538 = vpop.f32.mrb[0].mxu0
  %539 = vmatprep.mubr.f32.mxu0 %v77
  %540 = vmatmul.mubr.f32.gmra.mrb[0].mxu0 %v76
  %v541 = vpop.f32.mrb[0].mxu0
  %v542 = vadd.f32 0.0, %v541
  %v543 = vpop.f32.mrb[0].mxu0
  %544 = vmatprep.mubr.f32.mxu0 %v79
  %545 = vmatmul.mubr.f32.gmra.mrb[0].mxu0 %v78
  %v546 = vpop.f32.mrb[0].mxu0
  %v547 = vadd.f32 0.0, %v546
  %v548 = vpop.f32.mrb[0].mxu0
  %549 = vmatprep.mubr.f32.mxu0 %v81
  %550 = vmatmul.mubr.f32.gmra.mrb[0].mxu0 %v80
  %v551 = vpop.f32.mrb[0].mxu0
  %v552 = vadd.f32 0.0, %v551
  %v553 = vpop.f32.mrb[0].mxu0
  %554 = vmatprep.mubr.f32.mxu0 %v83
  %555 = vmatmul.mubr.f32.gmra.mrb[0].mxu0 %v82
  %v556 = vpop.f32.mrb[0].mxu0
  %v557 = vadd.f32 0.0, %v556
  %v558 = vpop.f32.mrb[0].mxu0
  %559 = vmatprep.mubr.f32.mxu0 %v85
  %560 = vmatmul.mubr.f32.gmra.mrb[0].mxu0 %v84
  %v561 = vpop.f32.mrb[0].mxu0
  %v562 = vadd.f32 0.0, %v561
  %v563 = vpop.f32.mrb[0].mxu0
  %564 = vmatprep.mubr.f32.mxu0 %v87
  %565 = vmatmul.mubr.f32.gmra.mrb[0].mxu0 %v86
  %v566 = vpop.f32.mrb[0].mxu0
  %v567 = vadd.f32 0.0, %v566
  %v568 = vpop.f32.mrb[0].mxu0
  %569 = vdwg.mxu0
  %v570 = vmax.f32 %v267, %v452
  %v571 = vmax.f32 %v272, %v457
  %v572 = vmax.f32 %v277, %v462
  %v573 = vmax.f32 %v282, %v467
  %v574 = vmax.f32 %v287, %v472
  %v575 = vmax.f32 %v292, %v477
  %v576 = vmax.f32 %v297, %v482
  %v577 = vmax.f32 %v302, %v487
  %v578 = vmax.f32 %v307, %v492
  %v579 = vmax.f32 %v312, %v497
  %v580 = vmax.f32 %v317, %v502
  %v581 = vmax.f32 %v322, %v507
  %v582 = vmax.f32 %v327, %v512
  %v583 = vmax.f32 %v332, %v517
  %v584 = vmax.f32 %v337, %v522
  %v585 = vmax.f32 %v342, %v527
  %v586 = vmax.f32 %v347, %v532
  %v587 = vmax.f32 %v352, %v537
  %v588 = vmax.f32 %v357, %v542
  %v589 = vmax.f32 %v362, %v547
  %v590 = vmax.f32 %v367, %v552
  %v591 = vmax.f32 %v372, %v557
  %v592 = vmax.f32 %v377, %v562
  %v593 = vmax.f32 %v382, %v567
  %594 = vmatprep.subr.mxu0 0.0
  %595 = vmatpush1.msra.mxu0 %v136
  %596 = vmatprep.subr.mxu0 0.0
  %597 = vmatpush1.msra.mxu0 %v137
  %598 = vmatprep.subr.mxu0 0.0
  %599 = vmatpush1.msra.mxu0 %v138
  %600 = vmatprep.subr.mxu0 0.0
  %601 = vmatpush1.msra.mxu0 %v139
  %602 = vmatprep.subr.mxu0 0.0
  %603 = vmatpush1.msra.mxu0 %v140
  %604 = vmatprep.subr.mxu0 0.0
  %605 = vmatpush1.msra.mxu0 %v141
  %606 = vmatprep.subr.mxu0 0.0
  %607 = vmatpush1.msra.mxu0 %v142
  %608 = vmatprep.subr.mxu0 0.0
  %609 = vmatpush1.msra.mxu0 %v143
  %610 = vmatprep.subr.mxu0 0.0
  %611 = vmatpush1.msra.mxu0 %v144
  %612 = vmatprep.subr.mxu0 0.0
  %613 = vmatpush1.msra.mxu0 %v145
  %614 = vmatprep.subr.mxu0 0.0
  %615 = vmatpush1.msra.mxu0 %v146
  %616 = vmatprep.subr.mxu0 0.0
  %617 = vmatpush1.msra.mxu0 %v147
  %618 = vmatprep.subr.mxu0 0.0
  %619 = vmatpush1.msra.mxu0 %v148
  %620 = vmatprep.subr.mxu0 0.0
  %621 = vmatpush1.msra.mxu0 %v149
  %622 = vmatprep.subr.mxu0 0.0
  %623 = vmatpush1.msra.mxu0 %v150
  %624 = vmatprep.subr.mxu0 0.0
  %625 = vmatpush1.msra.mxu0 %v151
  %626 = vmatprep.subr.mxu0 0.0
  %627 = vmatpush1.msra.mxu0 %v152
  %628 = vmatprep.subr.mxu0 0.0
  %629 = vmatpush1.msra.mxu0 %v153
  %630 = vmatprep.subr.mxu0 0.0
  %631 = vmatpush1.msra.mxu0 %v154
  %632 = vmatprep.subr.mxu0 0.0
  %633 = vmatpush1.msra.mxu0 %v155
  %634 = vmatprep.subr.mxu0 0.0
  %635 = vmatpush1.msra.mxu0 %v156
  %636 = vmatprep.subr.mxu0 0.0
  %637 = vmatpush1.msra.mxu0 %v157
  %638 = vmatprep.subr.mxu0 0.0
  %639 = vmatpush1.msra.mxu0 %v158
  %640 = vmatprep.subr.mxu0 0.0
  %641 = vmatpush1.msra.mxu0 %v159
  %642 = vmatprep.subr.mxu0 0.0
  %643 = vmatpush1.msra.mxu0 %v160
  %644 = vmatprep.subr.mxu0 0.0
  %645 = vmatpush1.msra.mxu0 %v161
  %646 = vmatprep.subr.mxu0 0.0
  %647 = vmatpush1.msra.mxu0 %v162
  %648 = vmatprep.subr.mxu0 0.0
  %649 = vmatpush1.msra.mxu0 %v163
  %650 = vmatprep.subr.mxu0 0.0
  %651 = vmatpush1.msra.mxu0 %v164
  %652 = vmatprep.subr.mxu0 0.0
  %653 = vmatpush1.msra.mxu0 %v165
  %654 = vmatprep.subr.mxu0 0.0
  %655 = vmatpush1.msra.mxu0 %v166
  %656 = vmatprep.subr.mxu0 0.0
  %657 = vmatpush1.msra.mxu0 %v167
  %658 = vmatprep.mubr.f32.mxu0 %v89
  %659 = vmatmul.mubr.f32.gmra.mrb[0].mxu0 %v88
  %v660 = vpop.f32.mrb[0].mxu0
  %v661 = vadd.f32 0.0, %v660
  %v662 = vpop.f32.mrb[0].mxu0
  %663 = vmatprep.mubr.f32.mxu0 %v91
  %664 = vmatmul.mubr.f32.gmra.mrb[0].mxu0 %v90
  %v665 = vpop.f32.mrb[0].mxu0
  %v666 = vadd.f32 0.0, %v665
  %v667 = vpop.f32.mrb[0].mxu0
  %668 = vmatprep.mubr.f32.mxu0 %v93
  %669 = vmatmul.mubr.f32.gmra.mrb[0].mxu0 %v92
  %v670 = vpop.f32.mrb[0].mxu0
  %v671 = vadd.f32 0.0, %v670
  %v672 = vpop.f32.mrb[0].mxu0
  %673 = vmatprep.mubr.f32.mxu0 %v95
  %674 = vmatmul.mubr.f32.gmra.mrb[0].mxu0 %v94
  %v675 = vpop.f32.mrb[0].mxu0
  %v676 = vadd.f32 0.0, %v675
  %v677 = vpop.f32.mrb[0].mxu0
  %678 = vmatprep.mubr.f32.mxu0 %v97
  %679 = vmatmul.mubr.f32.gmra.mrb[0].mxu0 %v96
  %v680 = vpop.f32.mrb[0].mxu0
  %v681 = vadd.f32 0.0, %v680
  %v682 = vpop.f32.mrb[0].mxu0
  %683 = vmatprep.mubr.f32.mxu0 %v99
  %684 = vmatmul.mubr.f32.gmra.mrb[0].mxu0 %v98
  %v685 = vpop.f32.mrb[0].mxu0
  %v686 = vadd.f32 0.0, %v685
  %v687 = vpop.f32.mrb[0].mxu0
  %688 = vmatprep.mubr.f32.mxu0 %v101
  %689 = vmatmul.mubr.f32.gmra.mrb[0].mxu0 %v100
  %v690 = vpop.f32.mrb[0].mxu0
  %v691 = vadd.f32 0.0, %v690
  %v692 = vpop.f32.mrb[0].mxu0
  %693 = vmatprep.mubr.f32.mxu0 %v103
  %694 = vmatmul.mubr.f32.gmra.mrb[0].mxu0 %v102
  %v695 = vpop.f32.mrb[0].mxu0
  %v696 = vadd.f32 0.0, %v695
  %v697 = vpop.f32.mrb[0].mxu0
  %698 = vmatprep.mubr.f32.mxu0 %v105
  %699 = vmatmul.mubr.f32.gmra.mrb[0].mxu0 %v104
  %v700 = vpop.f32.mrb[0].mxu0
  %v701 = vadd.f32 0.0, %v700
  %v702 = vpop.f32.mrb[0].mxu0
  %703 = vmatprep.mubr.f32.mxu0 %v107
  %704 = vmatmul.mubr.f32.gmra.mrb[0].mxu0 %v106
  %v705 = vpop.f32.mrb[0].mxu0
  %v706 = vadd.f32 0.0, %v705
  %v707 = vpop.f32.mrb[0].mxu0
  %708 = vmatprep.mubr.f32.mxu0 %v109
  %709 = vmatmul.mubr.f32.gmra.mrb[0].mxu0 %v108
  %v710 = vpop.f32.mrb[0].mxu0
  %v711 = vadd.f32 0.0, %v710
  %v712 = vpop.f32.mrb[0].mxu0
  %713 = vmatprep.mubr.f32.mxu0 %v111
  %714 = vmatmul.mubr.f32.gmra.mrb[0].mxu0 %v110
  %v715 = vpop.f32.mrb[0].mxu0
  %v716 = vadd.f32 0.0, %v715
  %v717 = vpop.f32.mrb[0].mxu0
  %718 = vmatprep.mubr.f32.mxu0 %v113
  %719 = vmatmul.mubr.f32.gmra.mrb[0].mxu0 %v112
  %v720 = vpop.f32.mrb[0].mxu0
  %v721 = vadd.f32 0.0, %v720
  %v722 = vpop.f32.mrb[0].mxu0
  %723 = vmatprep.mubr.f32.mxu0 %v115
  %724 = vmatmul.mubr.f32.gmra.mrb[0].mxu0 %v114
  %v725 = vpop.f32.mrb[0].mxu0
  %v726 = vadd.f32 0.0, %v725
  %v727 = vpop.f32.mrb[0].mxu0
  %728 = vmatprep.mubr.f32.mxu0 %v117
  %729 = vmatmul.mubr.f32.gmra.mrb[0].mxu0 %v116
  %v730 = vpop.f32.mrb[0].mxu0
  %v731 = vadd.f32 0.0, %v730
  %v732 = vpop.f32.mrb[0].mxu0
  %733 = vmatprep.mubr.f32.mxu0 %v119
  %734 = vmatmul.mubr.f32.gmra.mrb[0].mxu0 %v118
  %v735 = vpop.f32.mrb[0].mxu0
  %v736 = vadd.f32 0.0, %v735
  %v737 = vpop.f32.mrb[0].mxu0
  %738 = vmatprep.mubr.f32.mxu0 %v121
  %739 = vmatmul.mubr.f32.gmra.mrb[0].mxu0 %v120
  %v740 = vpop.f32.mrb[0].mxu0
  %v741 = vadd.f32 0.0, %v740
  %v742 = vpop.f32.mrb[0].mxu0
  %743 = vmatprep.mubr.f32.mxu0 %v123
  %744 = vmatmul.mubr.f32.gmra.mrb[0].mxu0 %v122
  %v745 = vpop.f32.mrb[0].mxu0
  %v746 = vadd.f32 0.0, %v745
  %v747 = vpop.f32.mrb[0].mxu0
  %748 = vmatprep.mubr.f32.mxu0 %v125
  %749 = vmatmul.mubr.f32.gmra.mrb[0].mxu0 %v124
  %v750 = vpop.f32.mrb[0].mxu0
  %v751 = vadd.f32 0.0, %v750
  %v752 = vpop.f32.mrb[0].mxu0
  %753 = vmatprep.mubr.f32.mxu0 %v127
  %754 = vmatmul.mubr.f32.gmra.mrb[0].mxu0 %v126
  %v755 = vpop.f32.mrb[0].mxu0
  %v756 = vadd.f32 0.0, %v755
  %v757 = vpop.f32.mrb[0].mxu0
  %758 = vmatprep.mubr.f32.mxu0 %v129
  %759 = vmatmul.mubr.f32.gmra.mrb[0].mxu0 %v128
  %v760 = vpop.f32.mrb[0].mxu0
  %v761 = vadd.f32 0.0, %v760
  %v762 = vpop.f32.mrb[0].mxu0
  %763 = vmatprep.mubr.f32.mxu0 %v131
  %764 = vmatmul.mubr.f32.gmra.mrb[0].mxu0 %v130
  %v765 = vpop.f32.mrb[0].mxu0
  %v766 = vadd.f32 0.0, %v765
  %v767 = vpop.f32.mrb[0].mxu0
  %768 = vmatprep.mubr.f32.mxu0 %v133
  %769 = vmatmul.mubr.f32.gmra.mrb[0].mxu0 %v132
  %v770 = vpop.f32.mrb[0].mxu0
  %v771 = vadd.f32 0.0, %v770
  %v772 = vpop.f32.mrb[0].mxu0
  %773 = vmatprep.mubr.f32.mxu0 %v135
  %774 = vmatmul.mubr.f32.gmra.mrb[0].mxu0 %v134
  %v775 = vpop.f32.mrb[0].mxu0
  %v776 = vadd.f32 0.0, %v775
  %v777 = vpop.f32.mrb[0].mxu0
  %778 = vdwg.mxu0
  %v779 = vmax.f32 %v570, %v661
  %v780 = vmax.f32 %v571, %v666
  %v781 = vmax.f32 %v572, %v671
  %v782 = vmax.f32 %v573, %v676
  %v783 = vmax.f32 %v574, %v681
  %v784 = vmax.f32 %v575, %v686
  %v785 = vmax.f32 %v576, %v691
  %v786 = vmax.f32 %v577, %v696
  %v787 = vmax.f32 %v578, %v701
  %v788 = vmax.f32 %v579, %v706
  %v789 = vmax.f32 %v580, %v711
  %v790 = vmax.f32 %v581, %v716
  %v791 = vmax.f32 %v582, %v721
  %v792 = vmax.f32 %v583, %v726
  %v793 = vmax.f32 %v584, %v731
  %v794 = vmax.f32 %v585, %v736
  %v795 = vmax.f32 %v586, %v741
  %v796 = vmax.f32 %v587, %v746
  %v797 = vmax.f32 %v588, %v751
  %v798 = vmax.f32 %v589, %v756
  %v799 = vmax.f32 %v590, %v761
  %v800 = vmax.f32 %v591, %v766
  %v801 = vmax.f32 %v592, %v771
  %v802 = vmax.f32 %v593, %v776
  %803 = vmatprep.subr.mxu0 0.0
  %804 = vmatpush1.msra.mxu0 %v168
  %805 = vmatprep.subr.mxu0 0.0
  %806 = vmatpush1.msra.mxu0 %v169
  %807 = vmatprep.subr.mxu0 0.0
  %808 = vmatpush1.msra.mxu0 %v170
  %809 = vmatprep.subr.mxu0 0.0
  %810 = vmatpush1.msra.mxu0 %v171
  %811 = vmatprep.subr.mxu0 0.0
  %812 = vmatpush1.msra.mxu0 %v172
  %813 = vmatprep.subr.mxu0 0.0
  %814 = vmatpush1.msra.mxu0 %v173
  %815 = vmatprep.subr.mxu0 0.0
  %816 = vmatpush1.msra.mxu0 %v174
  %817 = vmatprep.subr.mxu0 0.0
  %818 = vmatpush1.msra.mxu0 %v175
  %819 = vmatprep.subr.mxu0 0.0
  %820 = vmatpush1.msra.mxu0 %v176
  %821 = vmatprep.subr.mxu0 0.0
  %822 = vmatpush1.msra.mxu0 %v177
  %823 = vmatprep.subr.mxu0 0.0
  %824 = vmatpush1.msra.mxu0 %v178
  %825 = vmatprep.subr.mxu0 0.0
  %826 = vmatpush1.msra.mxu0 %v179
  %827 = vmatprep.subr.mxu0 0.0
  %828 = vmatpush1.msra.mxu0 %v180
  %829 = vmatprep.subr.mxu0 0.0
  %830 = vmatpush1.msra.mxu0 %v181
  %831 = vmatprep.subr.mxu0 0.0
  %832 = vmatpush1.msra.mxu0 %v182
  %833 = vmatprep.subr.mxu0 0.0
  %834 = vmatpush1.msra.mxu0 %v183
  %835 = vmatprep.subr.mxu0 0.0
  %836 = vmatpush1.msra.mxu0 %v184
  %837 = vmatprep.subr.mxu0 0.0
  %838 = vmatpush1.msra.mxu0 %v185
  %839 = vmatprep.subr.mxu0 0.0
  %840 = vmatpush1.msra.mxu0 %v186
  %841 = vmatprep.subr.mxu0 0.0
  %842 = vmatpush1.msra.mxu0 %v187
  %843 = vmatprep.subr.mxu0 0.0
  %844 = vmatpush1.msra.mxu0 %v188
  %845 = vmatprep.subr.mxu0 0.0
  %846 = vmatpush1.msra.mxu0 %v189
  %847 = vmatprep.subr.mxu0 0.0
  %848 = vmatpush1.msra.mxu0 %v190
  %849 = vmatprep.subr.mxu0 0.0
  %850 = vmatpush1.msra.mxu0 %v191
  %851 = vmatprep.subr.mxu0 0.0
  %852 = vmatpush1.msra.mxu0 %v192
  %853 = vmatprep.subr.mxu0 0.0
  %854 = vmatpush1.msra.mxu0 %v193
  %855 = vmatprep.subr.mxu0 0.0
  %856 = vmatpush1.msra.mxu0 %v194
  %857 = vmatprep.subr.mxu0 0.0
  %858 = vmatpush1.msra.mxu0 %v195
  %859 = vmatprep.subr.mxu0 0.0
  %860 = vmatpush1.msra.mxu0 %v196
  %861 = vmatprep.subr.mxu0 0.0
  %862 = vmatpush1.msra.mxu0 %v197
  %863 = vmatprep.subr.mxu0 0.0
  %864 = vmatpush1.msra.mxu0 %v198
  %865 = vmatprep.subr.mxu0 0.0
  %866 = vmatpush1.msra.mxu0 %v199
  %867 = vmatprep.mubr.f32.mxu0 %v89
  %868 = vmatmul.mubr.f32.gmra.mrb[0].mxu0 %v88
  %v869 = vpop.f32.mrb[0].mxu0
  %v870 = vadd.f32 0.0, %v869
  %v871 = vpop.f32.mrb[0].mxu0
  %872 = vmatprep.mubr.f32.mxu0 %v91
  %873 = vmatmul.mubr.f32.gmra.mrb[0].mxu0 %v90
  %v874 = vpop.f32.mrb[0].mxu0
  %v875 = vadd.f32 0.0, %v874
  %v876 = vpop.f32.mrb[0].mxu0
  %877 = vmatprep.mubr.f32.mxu0 %v93
  %878 = vmatmul.mubr.f32.gmra.mrb[0].mxu0 %v92
  %v879 = vpop.f32.mrb[0].mxu0
  %v880 = vadd.f32 0.0, %v879
  %v881 = vpop.f32.mrb[0].mxu0
  %882 = vmatprep.mubr.f32.mxu0 %v95
  %883 = vmatmul.mubr.f32.gmra.mrb[0].mxu0 %v94
  %v884 = vpop.f32.mrb[0].mxu0
  %v885 = vadd.f32 0.0, %v884
  %v886 = vpop.f32.mrb[0].mxu0
  %887 = vmatprep.mubr.f32.mxu0 %v97
  %888 = vmatmul.mubr.f32.gmra.mrb[0].mxu0 %v96
  %v889 = vpop.f32.mrb[0].mxu0
  %v890 = vadd.f32 0.0, %v889
  %v891 = vpop.f32.mrb[0].mxu0
  %892 = vmatprep.mubr.f32.mxu0 %v99
  %893 = vmatmul.mubr.f32.gmra.mrb[0].mxu0 %v98
  %v894 = vpop.f32.mrb[0].mxu0
  %v895 = vadd.f32 0.0, %v894
  %v896 = vpop.f32.mrb[0].mxu0
  %897 = vmatprep.mubr.f32.mxu0 %v101
  %898 = vmatmul.mubr.f32.gmra.mrb[0].mxu0 %v100
  %v899 = vpop.f32.mrb[0].mxu0
  %v900 = vadd.f32 0.0, %v899
  %v901 = vpop.f32.mrb[0].mxu0
  %902 = vmatprep.mubr.f32.mxu0 %v103
  %903 = vmatmul.mubr.f32.gmra.mrb[0].mxu0 %v102
  %v904 = vpop.f32.mrb[0].mxu0
  %v905 = vadd.f32 0.0, %v904
  %v906 = vpop.f32.mrb[0].mxu0
  %907 = vmatprep.mubr.f32.mxu0 %v105
  %908 = vmatmul.mubr.f32.gmra.mrb[0].mxu0 %v104
  %v909 = vpop.f32.mrb[0].mxu0
  %v910 = vadd.f32 0.0, %v909
  %v911 = vpop.f32.mrb[0].mxu0
  %912 = vmatprep.mubr.f32.mxu0 %v107
  %913 = vmatmul.mubr.f32.gmra.mrb[0].mxu0 %v106
  %v914 = vpop.f32.mrb[0].mxu0
  %v915 = vadd.f32 0.0, %v914
  %v916 = vpop.f32.mrb[0].mxu0
  %917 = vmatprep.mubr.f32.mxu0 %v109
  %918 = vmatmul.mubr.f32.gmra.mrb[0].mxu0 %v108
  %v919 = vpop.f32.mrb[0].mxu0
  %v920 = vadd.f32 0.0, %v919
  %v921 = vpop.f32.mrb[0].mxu0
  %922 = vmatprep.mubr.f32.mxu0 %v111
  %923 = vmatmul.mubr.f32.gmra.mrb[0].mxu0 %v110
  %v924 = vpop.f32.mrb[0].mxu0
  %v925 = vadd.f32 0.0, %v924
  %v926 = vpop.f32.mrb[0].mxu0
  %927 = vmatprep.mubr.f32.mxu0 %v113
  %928 = vmatmul.mubr.f32.gmra.mrb[0].mxu0 %v112
  %v929 = vpop.f32.mrb[0].mxu0
  %v930 = vadd.f32 0.0, %v929
  %v931 = vpop.f32.mrb[0].mxu0
  %932 = vmatprep.mubr.f32.mxu0 %v115
  %933 = vmatmul.mubr.f32.gmra.mrb[0].mxu0 %v114
  %v934 = vpop.f32.mrb[0].mxu0
  %v935 = vadd.f32 0.0, %v934
  %v936 = vpop.f32.mrb[0].mxu0
  %937 = vmatprep.mubr.f32.mxu0 %v117
  %938 = vmatmul.mubr.f32.gmra.mrb[0].mxu0 %v116
  %v939 = vpop.f32.mrb[0].mxu0
  %v940 = vadd.f32 0.0, %v939
  %v941 = vpop.f32.mrb[0].mxu0
  %942 = vmatprep.mubr.f32.mxu0 %v119
  %943 = vmatmul.mubr.f32.gmra.mrb[0].mxu0 %v118
  %v944 = vpop.f32.mrb[0].mxu0
  %v945 = vadd.f32 0.0, %v944
  %v946 = vpop.f32.mrb[0].mxu0
  %947 = vmatprep.mubr.f32.mxu0 %v121
  %948 = vmatmul.mubr.f32.gmra.mrb[0].mxu0 %v120
  %v949 = vpop.f32.mrb[0].mxu0
  %v950 = vadd.f32 0.0, %v949
  %v951 = vpop.f32.mrb[0].mxu0
  %952 = vmatprep.mubr.f32.mxu0 %v123
  %953 = vmatmul.mubr.f32.gmra.mrb[0].mxu0 %v122
  %v954 = vpop.f32.mrb[0].mxu0
  %v955 = vadd.f32 0.0, %v954
  %v956 = vpop.f32.mrb[0].mxu0
  %957 = vmatprep.mubr.f32.mxu0 %v125
  %958 = vmatmul.mubr.f32.gmra.mrb[0].mxu0 %v124
  %v959 = vpop.f32.mrb[0].mxu0
  %v960 = vadd.f32 0.0, %v959
  %v961 = vpop.f32.mrb[0].mxu0
  %962 = vmatprep.mubr.f32.mxu0 %v127
  %963 = vmatmul.mubr.f32.gmra.mrb[0].mxu0 %v126
  %v964 = vpop.f32.mrb[0].mxu0
  %v965 = vadd.f32 0.0, %v964
  %v966 = vpop.f32.mrb[0].mxu0
  %967 = vmatprep.mubr.f32.mxu0 %v129
  %968 = vmatmul.mubr.f32.gmra.mrb[0].mxu0 %v128
  %v969 = vpop.f32.mrb[0].mxu0
  %v970 = vadd.f32 0.0, %v969
  %v971 = vpop.f32.mrb[0].mxu0
  %972 = vmatprep.mubr.f32.mxu0 %v131
  %973 = vmatmul.mubr.f32.gmra.mrb[0].mxu0 %v130
  %v974 = vpop.f32.mrb[0].mxu0
  %v975 = vadd.f32 0.0, %v974
  %v976 = vpop.f32.mrb[0].mxu0
  %977 = vmatprep.mubr.f32.mxu0 %v133
  %978 = vmatmul.mubr.f32.gmra.mrb[0].mxu0 %v132
  %v979 = vpop.f32.mrb[0].mxu0
  %v980 = vadd.f32 0.0, %v979
  %v981 = vpop.f32.mrb[0].mxu0
  %982 = vmatprep.mubr.f32.mxu0 %v135
  %983 = vmatmul.mubr.f32.gmra.mrb[0].mxu0 %v134
  %v984 = vpop.f32.mrb[0].mxu0
  %v985 = vadd.f32 0.0, %v984
  %v986 = vpop.f32.mrb[0].mxu0
  %987 = vdwg.mxu0
  %v988 = vmax.f32 %v779, %v870
  %v989 = vmax.f32 %v780, %v875
  %v990 = vmax.f32 %v781, %v880
  %v991 = vmax.f32 %v782, %v885
  %v992 = vmax.f32 %v783, %v890
  %v993 = vmax.f32 %v784, %v895
  %v994 = vmax.f32 %v785, %v900
  %v995 = vmax.f32 %v786, %v905
  %v996 = vmax.f32 %v787, %v910
  %v997 = vmax.f32 %v788, %v915
  %v998 = vmax.f32 %v789, %v920
  %v999 = vmax.f32 %v790, %v925
  %v1000 = vmax.f32 %v791, %v930
  %v1001 = vmax.f32 %v792, %v935
  %v1002 = vmax.f32 %v793, %v940
  %v1003 = vmax.f32 %v794, %v945
  %v1004 = vmax.f32 %v795, %v950
  %v1005 = vmax.f32 %v796, %v955
  %v1006 = vmax.f32 %v797, %v960
  %v1007 = vmax.f32 %v798, %v965
  %v1008 = vmax.f32 %v799, %v970
  %v1009 = vmax.f32 %v800, %v975
  %v1010 = vmax.f32 %v801, %v980
  %v1011 = vmax.f32 %v802, %v985
  %v1012 = vld [vmem:[%s4] sm:$0x1]
  %v1014 = vlaneseq
  %v1015 = vshrl.u32 %v1014, 7
  %v1016 = vsub.s32 0, %v1015
  %v1017 = vrot.slane %v1012, %v1016
  %v1019 = vadd.f32 %v988, %v1017
  %v1020 = vadd.f32 %v989, %v1017
  %v1021 = vadd.f32 %v990, %v1017
  %v1022 = vadd.f32 %v991, %v1017
  %v1023 = vadd.f32 %v992, %v1017
  %v1024 = vadd.f32 %v993, %v1017
  %v1025 = vadd.f32 %v994, %v1017
  %v1026 = vadd.f32 %v995, %v1017
  %v1027 = vadd.f32 %v996, %v1017
  %v1028 = vadd.f32 %v997, %v1017
  %v1029 = vadd.f32 %v998, %v1017
  %v1030 = vadd.f32 %v999, %v1017
  %v1031 = vadd.f32 %v1000, %v1017
  %v1032 = vadd.f32 %v1001, %v1017
  %v1033 = vadd.f32 %v1002, %v1017
  %v1034 = vadd.f32 %v1003, %v1017
  %v1035 = vadd.f32 %v1004, %v1017
  %v1036 = vadd.f32 %v1005, %v1017
  %v1037 = vadd.f32 %v1006, %v1017
  %v1038 = vadd.f32 %v1007, %v1017
  %v1039 = vadd.f32 %v1008, %v1017
  %v1040 = vadd.f32 %v1009, %v1017
  %v1041 = vadd.f32 %v1010, %v1017
  %v1042 = vadd.f32 %v1011, %v1017
  %v1043 = vmax.f32 %v1019, 0.0
  %v1044 = vmax.f32 %v1020, 0.0
  %v1045 = vmax.f32 %v1021, 0.0
  %v1046 = vmax.f32 %v1022, 0.0
  %v1047 = vmax.f32 %v1023, 0.0
  %v1048 = vmax.f32 %v1024, 0.0
  %v1049 = vmax.f32 %v1025, 0.0
  %v1050 = vmax.f32 %v1026, 0.0
  %v1051 = vmax.f32 %v1027, 0.0
  %v1052 = vmax.f32 %v1028, 0.0
  %v1053 = vmax.f32 %v1029, 0.0
  %v1054 = vmax.f32 %v1030, 0.0
  %v1055 = vmax.f32 %v1031, 0.0
  %v1056 = vmax.f32 %v1032, 0.0
  %v1057 = vmax.f32 %v1033, 0.0
  %v1058 = vmax.f32 %v1034, 0.0
  %v1059 = vmax.f32 %v1035, 0.0
  %v1060 = vmax.f32 %v1036, 0.0
  %v1061 = vmax.f32 %v1037, 0.0
  %v1062 = vmax.f32 %v1038, 0.0
  %v1063 = vmax.f32 %v1039, 0.0
  %v1064 = vmax.f32 %v1040, 0.0
  %v1065 = vmax.f32 %v1041, 0.0
  %v1066 = vmax.f32 %v1042, 0.0
  %v1067 = vld [vmem:[%s5] sm:$0xff]
  %v1068 = vld [vmem:[%s5 + $0x8] sm:$0xff]
  %v1069 = vld [vmem:[%s5 + $0x10] sm:$0xff]
  %v1070 = vld [vmem:[%s5 + $0x18] sm:$0xff]
  %v1071 = vld [vmem:[%s5 + $0x20] sm:$0xff]
  %v1072 = vld [vmem:[%s5 + $0x28] sm:$0xff]
  %v1073 = vld [vmem:[%s5 + $0x30] sm:$0xff]
  %v1074 = vld [vmem:[%s5 + $0x38] sm:$0xff]
  %v1075 = vld [vmem:[%s5 + $0x40] sm:$0xff]
  %v1076 = vld [vmem:[%s5 + $0x48] sm:$0xff]
  %v1077 = vld [vmem:[%s5 + $0x50] sm:$0xff]
  %v1078 = vld [vmem:[%s5 + $0x58] sm:$0xff]
  %v1079 = vld [vmem:[%s5 + $0x60] sm:$0xff]
  %v1080 = vld [vmem:[%s5 + $0x68] sm:$0xff]
  %v1081 = vld [vmem:[%s5 + $0x70] sm:$0xff]
  %v1082 = vld [vmem:[%s5 + $0x78] sm:$0xff]
  %v1083 = vld [vmem:[%s5 + $0x80] sm:$0xff]
  %v1084 = vld [vmem:[%s5 + $0x88] sm:$0xff]
  %v1085 = vld [vmem:[%s5 + $0x90] sm:$0xff]
  %v1086 = vld [vmem:[%s5 + $0x98] sm:$0xff]
  %v1087 = vld [vmem:[%s5 + $0xa0] sm:$0xff]
  %v1088 = vld [vmem:[%s5 + $0xa8] sm:$0xff]
  %v1089 = vld [vmem:[%s5 + $0xb0] sm:$0xff]
  %v1090 = vld [vmem:[%s5 + $0xb8] sm:$0xff]
  %v1091 = vld [vmem:[%s5 + $0xc0] sm:$0xff]
  %v1092 = vld [vmem:[%s5 + $0xc8] sm:$0xff]
  %v1093 = vld [vmem:[%s5 + $0xd0] sm:$0xff]
  %v1094 = vld [vmem:[%s5 + $0xd8] sm:$0xff]
  %v1095 = vld [vmem:[%s5 + $0xe0] sm:$0xff]
  %v1096 = vld [vmem:[%s5 + $0xe8] sm:$0xff]
  %v1097 = vld [vmem:[%s5 + $0xf0] sm:$0xff]
  %v1098 = vld [vmem:[%s5 + $0xf8] sm:$0xff]
  %v1099 = vld [vmem:[%s5 + $0x100] sm:$0xff]
  %v1100 = vld [vmem:[%s5 + $0x108] sm:$0xff]
  %v1101 = vld [vmem:[%s5 + $0x110] sm:$0xff]
  %v1102 = vld [vmem:[%s5 + $0x118] sm:$0xff]
  %v1103 = vld [vmem:[%s5 + $0x120] sm:$0xff]
  %v1104 = vld [vmem:[%s5 + $0x128] sm:$0xff]
  %v1105 = vld [vmem:[%s5 + $0x130] sm:$0xff]
  %v1106 = vld [vmem:[%s5 + $0x138] sm:$0xff]
  %v1107 = vld [vmem:[%s5 + $0x140] sm:$0xff]
  %v1108 = vld [vmem:[%s5 + $0x148] sm:$0xff]
  %v1109 = vld [vmem:[%s5 + $0x150] sm:$0xff]
  %v1110 = vld [vmem:[%s5 + $0x158] sm:$0xff]
  %v1111 = vld [vmem:[%s5 + $0x160] sm:$0xff]
  %v1112 = vld [vmem:[%s5 + $0x168] sm:$0xff]
  %v1113 = vld [vmem:[%s5 + $0x170] sm:$0xff]
  %v1114 = vld [vmem:[%s5 + $0x178] sm:$0xff]
  %v1115 = vld [vmem:[%s5 + $0x180] sm:$0xff]
  %v1116 = vld [vmem:[%s5 + $0x188] sm:$0xff]
  %v1117 = vld [vmem:[%s5 + $0x190] sm:$0xff]
  %v1118 = vld [vmem:[%s5 + $0x198] sm:$0xff]
  %v1119 = vld [vmem:[%s5 + $0x1a0] sm:$0xff]
  %v1120 = vld [vmem:[%s5 + $0x1a8] sm:$0xff]
  %v1121 = vld [vmem:[%s5 + $0x1b0] sm:$0xff]
  %v1122 = vld [vmem:[%s5 + $0x1b8] sm:$0xff]
  %v1123 = vld [vmem:[%s5 + $0x1c0] sm:$0xff]
  %v1124 = vld [vmem:[%s5 + $0x1c8] sm:$0xff]
  %v1125 = vld [vmem:[%s5 + $0x1d0] sm:$0xff]
  %v1126 = vld [vmem:[%s5 + $0x1d8] sm:$0xff]
  %v1127 = vld [vmem:[%s5 + $0x1e0] sm:$0xff]
  %v1128 = vld [vmem:[%s5 + $0x1e8] sm:$0xff]
  %v1129 = vld [vmem:[%s5 + $0x1f0] sm:$0xff]
  %v1130 = vld [vmem:[%s5 + $0x1f8] sm:$0xff]
  %vm1131 = vcmask 523264
  %v1133 = vsel %vm1131, %v1046, 0
  %v1136 = vsel %vm1131, %v1047, 0
  %v1139 = vsel %vm1131, %v1048, 0
  %1141 = vmatprep.subr.mxu0 0.0
  %1142 = vmatpush1.msra.mxu0 %v1075
  %1143 = vmatprep.subr.mxu0 0.0
  %1144 = vmatpush1.msra.mxu0 %v1076
  %1145 = vmatprep.subr.mxu0 0.0
  %1146 = vmatpush1.msra.mxu0 %v1077
  %1147 = vmatprep.subr.mxu0 0.0
  %1148 = vmatpush1.msra.mxu0 %v1078
  %1149 = vmatprep.subr.mxu0 0.0
  %1150 = vmatpush1.msra.mxu0 %v1079
  %1151 = vmatprep.subr.mxu0 0.0
  %1152 = vmatpush1.msra.mxu0 %v1080
  %1153 = vmatprep.subr.mxu0 0.0
  %1154 = vmatpush1.msra.mxu0 %v1081
  %1155 = vmatprep.subr.mxu0 0.0
  %1156 = vmatpush1.msra.mxu0 %v1082
  %1157 = vmatprep.subr.mxu0 0.0
  %1158 = vmatpush1.msra.mxu0 0.0
  %1159 = vmatprep.subr.mxu0 0.0
  %1160 = vmatpush1.msra.mxu0 0.0
  %1161 = vmatprep.subr.mxu0 0.0
  %1162 = vmatpush1.msra.mxu0 0.0
  %1163 = vmatprep.subr.mxu0 0.0
  %1164 = vmatpush1.msra.mxu0 0.0
  %1165 = vmatprep.subr.mxu0 0.0
  %1166 = vmatpush1.msra.mxu0 0.0
  %1167 = vmatprep.subr.mxu0 0.0
  %1168 = vmatpush1.msra.mxu0 0.0
  %1169 = vmatprep.subr.mxu0 0.0
  %1170 = vmatpush1.msra.mxu0 0.0
  %1171 = vmatprep.subr.mxu0 0.0
  %1172 = vmatpush1.msra.mxu0 0.0
  %1173 = vmatprep.subr.mxu0 0.0
  %1174 = vmatpush1.msra.mxu0 0.0
  %1175 = vmatprep.subr.mxu0 0.0
  %1176 = vmatpush1.msra.mxu0 0.0
  %1177 = vmatprep.subr.mxu0 0.0
  %1178 = vmatpush1.msra.mxu0 0.0
  %1179 = vmatprep.subr.mxu0 0.0
  %1180 = vmatpush1.msra.mxu0 0.0
  %1181 = vmatprep.subr.mxu0 0.0
  %1182 = vmatpush1.msra.mxu0 0.0
  %1183 = vmatprep.subr.mxu0 0.0
  %1184 = vmatpush1.msra.mxu0 0.0
  %1185 = vmatprep.subr.mxu0 0.0
  %1186 = vmatpush1.msra.mxu0 0.0
  %1187 = vmatprep.subr.mxu0 0.0
  %1188 = vmatpush1.msra.mxu0 0.0
  %1189 = vmatprep.subr.mxu0 0.0
  %1190 = vmatpush1.msra.mxu0 0.0
  %1191 = vmatprep.subr.mxu0 0.0
  %1192 = vmatpush1.msra.mxu0 0.0
  %1193 = vmatprep.subr.mxu0 0.0
  %1194 = vmatpush1.msra.mxu0 0.0
  %1195 = vmatprep.subr.mxu0 0.0
  %1196 = vmatpush1.msra.mxu0 0.0
  %1197 = vmatprep.subr.mxu0 0.0
  %1198 = vmatpush1.msra.mxu0 0.0
  %1199 = vmatprep.subr.mxu0 0.0
  %1200 = vmatpush1.msra.mxu0 0.0
  %1201 = vmatprep.subr.mxu0 0.0
  %1202 = vmatpush1.msra.mxu0 0.0
  %1203 = vmatprep.subr.mxu0 0.0
  %1204 = vmatpush1.msra.mxu0 0.0
  %1205 = vmatprep.mubr.f32.mxu0 0.0
  %1206 = vmatmul.mubr.f32.gmra.mrb[0].mxu0 %v1133
  %v1207 = vpop.f32.mrb[0].mxu0
  %v1208 = vadd.f32 0.0, %v1207
  %v1209 = vpop.f32.mrb[0].mxu0
  %1210 = vmatprep.mubr.f32.mxu0 0.0
  %1211 = vmatmul.mubr.f32.gmra.mrb[0].mxu0 %v1136
  %v1212 = vpop.f32.mrb[0].mxu0
  %v1213 = vadd.f32 0.0, %v1212
  %v1214 = vpop.f32.mrb[0].mxu0
  %1215 = vmatprep.mubr.f32.mxu0 0.0
  %1216 = vmatmul.mubr.f32.gmra.mrb[0].mxu0 %v1139
  %v1217 = vpop.f32.mrb[0].mxu0
  %v1218 = vadd.f32 0.0, %v1217
  %v1219 = vpop.f32.mrb[0].mxu0
  %1220 = vdwg.mxu0
  %v1222 = vsel %vm1131, %v1043, 0
  %v1225 = vsel %vm1131, %v1044, 0
  %v1228 = vsel %vm1131, %v1045, 0
  %1230 = vmatprep.subr.mxu0 0.0
  %1231 = vmatpush1.msra.mxu0 %v1067
  %1232 = vmatprep.subr.mxu0 0.0
  %1233 = vmatpush1.msra.mxu0 %v1068
  %1234 = vmatprep.subr.mxu0 0.0
  %1235 = vmatpush1.msra.mxu0 %v1069
  %1236 = vmatprep.subr.mxu0 0.0
  %1237 = vmatpush1.msra.mxu0 %v1070
  %1238 = vmatprep.subr.mxu0 0.0
  %1239 = vmatpush1.msra.mxu0 %v1071
  %1240 = vmatprep.subr.mxu0 0.0
  %1241 = vmatpush1.msra.mxu0 %v1072
  %1242 = vmatprep.subr.mxu0 0.0
  %1243 = vmatpush1.msra.mxu0 %v1073
  %1244 = vmatprep.subr.mxu0 0.0
  %1245 = vmatpush1.msra.mxu0 %v1074
  %1246 = vmatprep.subr.mxu0 0.0
  %1247 = vmatpush1.msra.mxu0 0.0
  %1248 = vmatprep.subr.mxu0 0.0
  %1249 = vmatpush1.msra.mxu0 0.0
  %1250 = vmatprep.subr.mxu0 0.0
  %1251 = vmatpush1.msra.mxu0 0.0
  %1252 = vmatprep.subr.mxu0 0.0
  %1253 = vmatpush1.msra.mxu0 0.0
  %1254 = vmatprep.subr.mxu0 0.0
  %1255 = vmatpush1.msra.mxu0 0.0
  %1256 = vmatprep.subr.mxu0 0.0
  %1257 = vmatpush1.msra.mxu0 0.0
  %1258 = vmatprep.subr.mxu0 0.0
  %1259 = vmatpush1.msra.mxu0 0.0
  %1260 = vmatprep.subr.mxu0 0.0
  %1261 = vmatpush1.msra.mxu0 0.0
  %1262 = vmatprep.subr.mxu0 0.0
  %1263 = vmatpush1.msra.mxu0 0.0
  %1264 = vmatprep.subr.mxu0 0.0
  %1265 = vmatpush1.msra.mxu0 0.0
  %1266 = vmatprep.subr.mxu0 0.0
  %1267 = vmatpush1.msra.mxu0 0.0
  %1268 = vmatprep.subr.mxu0 0.0
  %1269 = vmatpush1.msra.mxu0 0.0
  %1270 = vmatprep.subr.mxu0 0.0
  %1271 = vmatpush1.msra.mxu0 0.0
  %1272 = vmatprep.subr.mxu0 0.0
  %1273 = vmatpush1.msra.mxu0 0.0
  %1274 = vmatprep.subr.mxu0 0.0
  %1275 = vmatpush1.msra.mxu0 0.0
  %1276 = vmatprep.subr.mxu0 0.0
  %1277 = vmatpush1.msra.mxu0 0.0
  %1278 = vmatprep.subr.mxu0 0.0
  %1279 = vmatpush1.msra.mxu0 0.0
  %1280 = vmatprep.subr.mxu0 0.0
  %1281 = vmatpush1.msra.mxu0 0.0
  %1282 = vmatprep.subr.mxu0 0.0
  %1283 = vmatpush1.msra.mxu0 0.0
  %1284 = vmatprep.subr.mxu0 0.0
  %1285 = vmatpush1.msra.mxu0 0.0
  %1286 = vmatprep.subr.mxu0 0.0
  %1287 = vmatpush1.msra.mxu0 0.0
  %1288 = vmatprep.subr.mxu0 0.0
  %1289 = vmatpush1.msra.mxu0 0.0
  %1290 = vmatprep.subr.mxu0 0.0
  %1291 = vmatpush1.msra.mxu0 0.0
  %1292 = vmatprep.subr.mxu0 0.0
  %1293 = vmatpush1.msra.mxu0 0.0
  %1294 = vmatprep.mubr.f32.mxu0 0.0
  %1295 = vmatmul.mubr.f32.gmra.mrb[0].mxu0 %v1222
  %v1296 = vpop.f32.mrb[0].mxu0
  %v1297 = vadd.f32 %v1208, %v1296
  %v1298 = vpop.f32.mrb[0].mxu0
  %1299 = vmatprep.mubr.f32.mxu0 0.0
  %1300 = vmatmul.mubr.f32.gmra.mrb[0].mxu0 %v1225
  %v1301 = vpop.f32.mrb[0].mxu0
  %v1302 = vadd.f32 %v1213, %v1301
  %v1303 = vpop.f32.mrb[0].mxu0
  %1304 = vmatprep.mubr.f32.mxu0 0.0
  %1305 = vmatmul.mubr.f32.gmra.mrb[0].mxu0 %v1228
  %v1306 = vpop.f32.mrb[0].mxu0
  %v1307 = vadd.f32 %v1218, %v1306
  %v1308 = vpop.f32.mrb[0].mxu0
  %1309 = vdwg.mxu0
  %v1311 = vsel %vm1131, %v1049, 0
  %v1314 = vsel %vm1131, %v1050, 0
  %v1317 = vsel %vm1131, %v1051, 0
  %1319 = vmatprep.subr.mxu0 0.0
  %1320 = vmatpush1.msra.mxu0 %v1083
  %1321 = vmatprep.subr.mxu0 0.0
  %1322 = vmatpush1.msra.mxu0 %v1084
  %1323 = vmatprep.subr.mxu0 0.0
  %1324 = vmatpush1.msra.mxu0 %v1085
  %1325 = vmatprep.subr.mxu0 0.0
  %1326 = vmatpush1.msra.mxu0 %v1086
  %1327 = vmatprep.subr.mxu0 0.0
  %1328 = vmatpush1.msra.mxu0 %v1087
  %1329 = vmatprep.subr.mxu0 0.0
  %1330 = vmatpush1.msra.mxu0 %v1088
  %1331 = vmatprep.subr.mxu0 0.0
  %1332 = vmatpush1.msra.mxu0 %v1089
  %1333 = vmatprep.subr.mxu0 0.0
  %1334 = vmatpush1.msra.mxu0 %v1090
  %1335 = vmatprep.subr.mxu0 0.0
  %1336 = vmatpush1.msra.mxu0 0.0
  %1337 = vmatprep.subr.mxu0 0.0
  %1338 = vmatpush1.msra.mxu0 0.0
  %1339 = vmatprep.subr.mxu0 0.0
  %1340 = vmatpush1.msra.mxu0 0.0
  %1341 = vmatprep.subr.mxu0 0.0
  %1342 = vmatpush1.msra.mxu0 0.0
  %1343 = vmatprep.subr.mxu0 0.0
  %1344 = vmatpush1.msra.mxu0 0.0
  %1345 = vmatprep.subr.mxu0 0.0
  %1346 = vmatpush1.msra.mxu0 0.0
  %1347 = vmatprep.subr.mxu0 0.0
  %1348 = vmatpush1.msra.mxu0 0.0
  %1349 = vmatprep.subr.mxu0 0.0
  %1350 = vmatpush1.msra.mxu0 0.0
  %1351 = vmatprep.subr.mxu0 0.0
  %1352 = vmatpush1.msra.mxu0 0.0
  %1353 = vmatprep.subr.mxu0 0.0
  %1354 = vmatpush1.msra.mxu0 0.0
  %1355 = vmatprep.subr.mxu0 0.0
  %1356 = vmatpush1.msra.mxu0 0.0
  %1357 = vmatprep.subr.mxu0 0.0
  %1358 = vmatpush1.msra.mxu0 0.0
  %1359 = vmatprep.subr.mxu0 0.0
  %1360 = vmatpush1.msra.mxu0 0.0
  %1361 = vmatprep.subr.mxu0 0.0
  %1362 = vmatpush1.msra.mxu0 0.0
  %1363 = vmatprep.subr.mxu0 0.0
  %1364 = vmatpush1.msra.mxu0 0.0
  %1365 = vmatprep.subr.mxu0 0.0
  %1366 = vmatpush1.msra.mxu0 0.0
  %1367 = vmatprep.subr.mxu0 0.0
  %1368 = vmatpush1.msra.mxu0 0.0
  %1369 = vmatprep.subr.mxu0 0.0
  %1370 = vmatpush1.msra.mxu0 0.0
  %1371 = vmatprep.subr.mxu0 0.0
  %1372 = vmatpush1.msra.mxu0 0.0
  %1373 = vmatprep.subr.mxu0 0.0
  %1374 = vmatpush1.msra.mxu0 0.0
  %1375 = vmatprep.subr.mxu0 0.0
  %1376 = vmatpush1.msra.mxu0 0.0
  %1377 = vmatprep.subr.mxu0 0.0
  %1378 = vmatpush1.msra.mxu0 0.0
  %1379 = vmatprep.subr.mxu0 0.0
  %1380 = vmatpush1.msra.mxu0 0.0
  %1381 = vmatprep.subr.mxu0 0.0
  %1382 = vmatpush1.msra.mxu0 0.0
  %1383 = vmatprep.mubr.f32.mxu0 0.0
  %1384 = vmatmul.mubr.f32.gmra.mrb[0].mxu0 %v1311
  %v1385 = vpop.f32.mrb[0].mxu0
  %v1386 = vadd.f32 0.0, %v1385
  %v1387 = vpop.f32.mrb[0].mxu0
  %1388 = vmatprep.mubr.f32.mxu0 0.0
  %1389 = vmatmul.mubr.f32.gmra.mrb[0].mxu0 %v1314
  %v1390 = vpop.f32.mrb[0].mxu0
  %v1391 = vadd.f32 0.0, %v1390
  %v1392 = vpop.f32.mrb[0].mxu0
  %1393 = vmatprep.mubr.f32.mxu0 0.0
  %1394 = vmatmul.mubr.f32.gmra.mrb[0].mxu0 %v1317
  %v1395 = vpop.f32.mrb[0].mxu0
  %v1396 = vadd.f32 0.0, %v1395
  %v1397 = vpop.f32.mrb[0].mxu0
  %1398 = vdwg.mxu0
  %v1399 = vadd.f32 %v1297, %v1386
  %v1400 = vadd.f32 %v1302, %v1391
  %v1401 = vadd.f32 %v1307, %v1396
  %v1403 = vsel %vm1131, %v1052, 0
  %v1406 = vsel %vm1131, %v1053, 0
  %v1409 = vsel %vm1131, %v1054, 0
  %1411 = vmatprep.subr.mxu0 0.0
  %1412 = vmatpush1.msra.mxu0 %v1091
  %1413 = vmatprep.subr.mxu0 0.0
  %1414 = vmatpush1.msra.mxu0 %v1092
  %1415 = vmatprep.subr.mxu0 0.0
  %1416 = vmatpush1.msra.mxu0 %v1093
  %1417 = vmatprep.subr.mxu0 0.0
  %1418 = vmatpush1.msra.mxu0 %v1094
  %1419 = vmatprep.subr.mxu0 0.0
  %1420 = vmatpush1.msra.mxu0 %v1095
  %1421 = vmatprep.subr.mxu0 0.0
  %1422 = vmatpush1.msra.mxu0 %v1096
  %1423 = vmatprep.subr.mxu0 0.0
  %1424 = vmatpush1.msra.mxu0 %v1097
  %1425 = vmatprep.subr.mxu0 0.0
  %1426 = vmatpush1.msra.mxu0 %v1098
  %1427 = vmatprep.subr.mxu0 0.0
  %1428 = vmatpush1.msra.mxu0 0.0
  %1429 = vmatprep.subr.mxu0 0.0
  %1430 = vmatpush1.msra.mxu0 0.0
  %1431 = vmatprep.subr.mxu0 0.0
  %1432 = vmatpush1.msra.mxu0 0.0
  %1433 = vmatprep.subr.mxu0 0.0
  %1434 = vmatpush1.msra.mxu0 0.0
  %1435 = vmatprep.subr.mxu0 0.0
  %1436 = vmatpush1.msra.mxu0 0.0
  %1437 = vmatprep.subr.mxu0 0.0
  %1438 = vmatpush1.msra.mxu0 0.0
  %1439 = vmatprep.subr.mxu0 0.0
  %1440 = vmatpush1.msra.mxu0 0.0
  %1441 = vmatprep.subr.mxu0 0.0
  %1442 = vmatpush1.msra.mxu0 0.0
  %1443 = vmatprep.subr.mxu0 0.0
  %1444 = vmatpush1.msra.mxu0 0.0
  %1445 = vmatprep.subr.mxu0 0.0
  %1446 = vmatpush1.msra.mxu0 0.0
  %1447 = vmatprep.subr.mxu0 0.0
  %1448 = vmatpush1.msra.mxu0 0.0
  %1449 = vmatprep.subr.mxu0 0.0
  %1450 = vmatpush1.msra.mxu0 0.0
  %1451 = vmatprep.subr.mxu0 0.0
  %1452 = vmatpush1.msra.mxu0 0.0
  %1453 = vmatprep.subr.mxu0 0.0
  %1454 = vmatpush1.msra.mxu0 0.0
  %1455 = vmatprep.subr.mxu0 0.0
  %1456 = vmatpush1.msra.mxu0 0.0
  %1457 = vmatprep.subr.mxu0 0.0
  %1458 = vmatpush1.msra.mxu0 0.0
  %1459 = vmatprep.subr.mxu0 0.0
  %1460 = vmatpush1.msra.mxu0 0.0
  %1461 = vmatprep.subr.mxu0 0.0
  %1462 = vmatpush1.msra.mxu0 0.0
  %1463 = vmatprep.subr.mxu0 0.0
  %1464 = vmatpush1.msra.mxu0 0.0
  %1465 = vmatprep.subr.mxu0 0.0
  %1466 = vmatpush1.msra.mxu0 0.0
  %1467 = vmatprep.subr.mxu0 0.0
  %1468 = vmatpush1.msra.mxu0 0.0
  %1469 = vmatprep.subr.mxu0 0.0
  %1470 = vmatpush1.msra.mxu0 0.0
  %1471 = vmatprep.subr.mxu0 0.0
  %1472 = vmatpush1.msra.mxu0 0.0
  %1473 = vmatprep.subr.mxu0 0.0
  %1474 = vmatpush1.msra.mxu0 0.0
  %1475 = vmatprep.mubr.f32.mxu0 0.0
  %1476 = vmatmul.mubr.f32.gmra.mrb[0].mxu0 %v1403
  %v1477 = vpop.f32.mrb[0].mxu0
  %v1478 = vadd.f32 0.0, %v1477
  %v1479 = vpop.f32.mrb[0].mxu0
  %1480 = vmatprep.mubr.f32.mxu0 0.0
  %1481 = vmatmul.mubr.f32.gmra.mrb[0].mxu0 %v1406
  %v1482 = vpop.f32.mrb[0].mxu0
  %v1483 = vadd.f32 0.0, %v1482
  %v1484 = vpop.f32.mrb[0].mxu0
  %1485 = vmatprep.mubr.f32.mxu0 0.0
  %1486 = vmatmul.mubr.f32.gmra.mrb[0].mxu0 %v1409
  %v1487 = vpop.f32.mrb[0].mxu0
  %v1488 = vadd.f32 0.0, %v1487
  %v1489 = vpop.f32.mrb[0].mxu0
  %1490 = vdwg.mxu0
  %v1491 = vadd.f32 %v1399, %v1478
  %v1492 = vadd.f32 %v1400, %v1483
  %v1493 = vadd.f32 %v1401, %v1488
  %v1495 = vsel %vm1131, %v1055, 0
  %v1498 = vsel %vm1131, %v1056, 0
  %v1501 = vsel %vm1131, %v1057, 0
  %1503 = vmatprep.subr.mxu0 0.0
  %1504 = vmatpush1.msra.mxu0 %v1099
  %1505 = vmatprep.subr.mxu0 0.0
  %1506 = vmatpush1.msra.mxu0 %v1100
  %1507 = vmatprep.subr.mxu0 0.0
  %1508 = vmatpush1.msra.mxu0 %v1101
  %1509 = vmatprep.subr.mxu0 0.0
  %1510 = vmatpush1.msra.mxu0 %v1102
  %1511 = vmatprep.subr.mxu0 0.0
  %1512 = vmatpush1.msra.mxu0 %v1103
  %1513 = vmatprep.subr.mxu0 0.0
  %1514 = vmatpush1.msra.mxu0 %v1104
  %1515 = vmatprep.subr.mxu0 0.0
  %1516 = vmatpush1.msra.mxu0 %v1105
  %1517 = vmatprep.subr.mxu0 0.0
  %1518 = vmatpush1.msra.mxu0 %v1106
  %1519 = vmatprep.subr.mxu0 0.0
  %1520 = vmatpush1.msra.mxu0 0.0
  %1521 = vmatprep.subr.mxu0 0.0
  %1522 = vmatpush1.msra.mxu0 0.0
  %1523 = vmatprep.subr.mxu0 0.0
  %1524 = vmatpush1.msra.mxu0 0.0
  %1525 = vmatprep.subr.mxu0 0.0
  %1526 = vmatpush1.msra.mxu0 0.0
  %1527 = vmatprep.subr.mxu0 0.0
  %1528 = vmatpush1.msra.mxu0 0.0
  %1529 = vmatprep.subr.mxu0 0.0
  %1530 = vmatpush1.msra.mxu0 0.0
  %1531 = vmatprep.subr.mxu0 0.0
  %1532 = vmatpush1.msra.mxu0 0.0
  %1533 = vmatprep.subr.mxu0 0.0
  %1534 = vmatpush1.msra.mxu0 0.0
  %1535 = vmatprep.subr.mxu0 0.0
  %1536 = vmatpush1.msra.mxu0 0.0
  %1537 = vmatprep.subr.mxu0 0.0
  %1538 = vmatpush1.msra.mxu0 0.0
  %1539 = vmatprep.subr.mxu0 0.0
  %1540 = vmatpush1.msra.mxu0 0.0
  %1541 = vmatprep.subr.mxu0 0.0
  %1542 = vmatpush1.msra.mxu0 0.0
  %1543 = vmatprep.subr.mxu0 0.0
  %1544 = vmatpush1.msra.mxu0 0.0
  %1545 = vmatprep.subr.mxu0 0.0
  %1546 = vmatpush1.msra.mxu0 0.0
  %1547 = vmatprep.subr.mxu0 0.0
  %1548 = vmatpush1.msra.mxu0 0.0
  %1549 = vmatprep.subr.mxu0 0.0
  %1550 = vmatpush1.msra.mxu0 0.0
  %1551 = vmatprep.subr.mxu0 0.0
  %1552 = vmatpush1.msra.mxu0 0.0
  %1553 = vmatprep.subr.mxu0 0.0
  %1554 = vmatpush1.msra.mxu0 0.0
  %1555 = vmatprep.subr.mxu0 0.0
  %1556 = vmatpush1.msra.mxu0 0.0
  %1557 = vmatprep.subr.mxu0 0.0
  %1558 = vmatpush1.msra.mxu0 0.0
  %1559 = vmatprep.subr.mxu0 0.0
  %1560 = vmatpush1.msra.mxu0 0.0
  %1561 = vmatprep.subr.mxu0 0.0
  %1562 = vmatpush1.msra.mxu0 0.0
  %1563 = vmatprep.subr.mxu0 0.0
  %1564 = vmatpush1.msra.mxu0 0.0
  %1565 = vmatprep.subr.mxu0 0.0
  %1566 = vmatpush1.msra.mxu0 0.0
  %1567 = vmatprep.mubr.f32.mxu0 0.0
  %1568 = vmatmul.mubr.f32.gmra.mrb[0].mxu0 %v1495
  %v1569 = vpop.f32.mrb[0].mxu0
  %v1570 = vadd.f32 0.0, %v1569
  %v1571 = vpop.f32.mrb[0].mxu0
  %1572 = vmatprep.mubr.f32.mxu0 0.0
  %1573 = vmatmul.mubr.f32.gmra.mrb[0].mxu0 %v1498
  %v1574 = vpop.f32.mrb[0].mxu0
  %v1575 = vadd.f32 0.0, %v1574
  %v1576 = vpop.f32.mrb[0].mxu0
  %1577 = vmatprep.mubr.f32.mxu0 0.0
  %1578 = vmatmul.mubr.f32.gmra.mrb[0].mxu0 %v1501
  %v1579 = vpop.f32.mrb[0].mxu0
  %v1580 = vadd.f32 0.0, %v1579
  %v1581 = vpop.f32.mrb[0].mxu0
  %1582 = vdwg.mxu0
  %v1583 = vadd.f32 %v1491, %v1570
  %v1584 = vadd.f32 %v1492, %v1575
  %v1585 = vadd.f32 %v1493, %v1580
  %v1587 = vsel %vm1131, %v1058, 0
  %v1590 = vsel %vm1131, %v1059, 0
  %v1593 = vsel %vm1131, %v1060, 0
  %1595 = vmatprep.subr.mxu0 0.0
  %1596 = vmatpush1.msra.mxu0 %v1107
  %1597 = vmatprep.subr.mxu0 0.0
  %1598 = vmatpush1.msra.mxu0 %v1108
  %1599 = vmatprep.subr.mxu0 0.0
  %1600 = vmatpush1.msra.mxu0 %v1109
  %1601 = vmatprep.subr.mxu0 0.0
  %1602 = vmatpush1.msra.mxu0 %v1110
  %1603 = vmatprep.subr.mxu0 0.0
  %1604 = vmatpush1.msra.mxu0 %v1111
  %1605 = vmatprep.subr.mxu0 0.0
  %1606 = vmatpush1.msra.mxu0 %v1112
  %1607 = vmatprep.subr.mxu0 0.0
  %1608 = vmatpush1.msra.mxu0 %v1113
  %1609 = vmatprep.subr.mxu0 0.0
  %1610 = vmatpush1.msra.mxu0 %v1114
  %1611 = vmatprep.subr.mxu0 0.0
  %1612 = vmatpush1.msra.mxu0 0.0
  %1613 = vmatprep.subr.mxu0 0.0
  %1614 = vmatpush1.msra.mxu0 0.0
  %1615 = vmatprep.subr.mxu0 0.0
  %1616 = vmatpush1.msra.mxu0 0.0
  %1617 = vmatprep.subr.mxu0 0.0
  %1618 = vmatpush1.msra.mxu0 0.0
  %1619 = vmatprep.subr.mxu0 0.0
  %1620 = vmatpush1.msra.mxu0 0.0
  %1621 = vmatprep.subr.mxu0 0.0
  %1622 = vmatpush1.msra.mxu0 0.0
  %1623 = vmatprep.subr.mxu0 0.0
  %1624 = vmatpush1.msra.mxu0 0.0
  %1625 = vmatprep.subr.mxu0 0.0
  %1626 = vmatpush1.msra.mxu0 0.0
  %1627 = vmatprep.subr.mxu0 0.0
  %1628 = vmatpush1.msra.mxu0 0.0
  %1629 = vmatprep.subr.mxu0 0.0
  %1630 = vmatpush1.msra.mxu0 0.0
  %1631 = vmatprep.subr.mxu0 0.0
  %1632 = vmatpush1.msra.mxu0 0.0
  %1633 = vmatprep.subr.mxu0 0.0
  %1634 = vmatpush1.msra.mxu0 0.0
  %1635 = vmatprep.subr.mxu0 0.0
  %1636 = vmatpush1.msra.mxu0 0.0
  %1637 = vmatprep.subr.mxu0 0.0
  %1638 = vmatpush1.msra.mxu0 0.0
  %1639 = vmatprep.subr.mxu0 0.0
  %1640 = vmatpush1.msra.mxu0 0.0
  %1641 = vmatprep.subr.mxu0 0.0
  %1642 = vmatpush1.msra.mxu0 0.0
  %1643 = vmatprep.subr.mxu0 0.0
  %1644 = vmatpush1.msra.mxu0 0.0
  %1645 = vmatprep.subr.mxu0 0.0
  %1646 = vmatpush1.msra.mxu0 0.0
  %1647 = vmatprep.subr.mxu0 0.0
  %1648 = vmatpush1.msra.mxu0 0.0
  %1649 = vmatprep.subr.mxu0 0.0
  %1650 = vmatpush1.msra.mxu0 0.0
  %1651 = vmatprep.subr.mxu0 0.0
  %1652 = vmatpush1.msra.mxu0 0.0
  %1653 = vmatprep.subr.mxu0 0.0
  %1654 = vmatpush1.msra.mxu0 0.0
  %1655 = vmatprep.subr.mxu0 0.0
  %1656 = vmatpush1.msra.mxu0 0.0
  %1657 = vmatprep.subr.mxu0 0.0
  %1658 = vmatpush1.msra.mxu0 0.0
  %1659 = vmatprep.mubr.f32.mxu0 0.0
  %1660 = vmatmul.mubr.f32.gmra.mrb[0].mxu0 %v1587
  %v1661 = vpop.f32.mrb[0].mxu0
  %v1662 = vadd.f32 0.0, %v1661
  %v1663 = vpop.f32.mrb[0].mxu0
  %1664 = vmatprep.mubr.f32.mxu0 0.0
  %1665 = vmatmul.mubr.f32.gmra.mrb[0].mxu0 %v1590
  %v1666 = vpop.f32.mrb[0].mxu0
  %v1667 = vadd.f32 0.0, %v1666
  %v1668 = vpop.f32.mrb[0].mxu0
  %1669 = vmatprep.mubr.f32.mxu0 0.0
  %1670 = vmatmul.mubr.f32.gmra.mrb[0].mxu0 %v1593
  %v1671 = vpop.f32.mrb[0].mxu0
  %v1672 = vadd.f32 0.0, %v1671
  %v1673 = vpop.f32.mrb[0].mxu0
  %1674 = vdwg.mxu0
  %v1675 = vadd.f32 %v1583, %v1662
  %v1676 = vadd.f32 %v1584, %v1667
  %v1677 = vadd.f32 %v1585, %v1672
  %v1679 = vsel %vm1131, %v1061, 0
  %v1682 = vsel %vm1131, %v1062, 0
  %v1685 = vsel %vm1131, %v1063, 0
  %1687 = vmatprep.subr.mxu0 0.0
  %1688 = vmatpush1.msra.mxu0 %v1115
  %1689 = vmatprep.subr.mxu0 0.0
  %1690 = vmatpush1.msra.mxu0 %v1116
  %1691 = vmatprep.subr.mxu0 0.0
  %1692 = vmatpush1.msra.mxu0 %v1117
  %1693 = vmatprep.subr.mxu0 0.0
  %1694 = vmatpush1.msra.mxu0 %v1118
  %1695 = vmatprep.subr.mxu0 0.0
  %1696 = vmatpush1.msra.mxu0 %v1119
  %1697 = vmatprep.subr.mxu0 0.0
  %1698 = vmatpush1.msra.mxu0 %v1120
  %1699 = vmatprep.subr.mxu0 0.0
  %1700 = vmatpush1.msra.mxu0 %v1121
  %1701 = vmatprep.subr.mxu0 0.0
  %1702 = vmatpush1.msra.mxu0 %v1122
  %1703 = vmatprep.subr.mxu0 0.0
  %1704 = vmatpush1.msra.mxu0 0.0
  %1705 = vmatprep.subr.mxu0 0.0
  %1706 = vmatpush1.msra.mxu0 0.0
  %1707 = vmatprep.subr.mxu0 0.0
  %1708 = vmatpush1.msra.mxu0 0.0
  %1709 = vmatprep.subr.mxu0 0.0
  %1710 = vmatpush1.msra.mxu0 0.0
  %1711 = vmatprep.subr.mxu0 0.0
  %1712 = vmatpush1.msra.mxu0 0.0
  %1713 = vmatprep.subr.mxu0 0.0
  %1714 = vmatpush1.msra.mxu0 0.0
  %1715 = vmatprep.subr.mxu0 0.0
  %1716 = vmatpush1.msra.mxu0 0.0
  %1717 = vmatprep.subr.mxu0 0.0
  %1718 = vmatpush1.msra.mxu0 0.0
  %1719 = vmatprep.subr.mxu0 0.0
  %1720 = vmatpush1.msra.mxu0 0.0
  %1721 = vmatprep.subr.mxu0 0.0
  %1722 = vmatpush1.msra.mxu0 0.0
  %1723 = vmatprep.subr.mxu0 0.0
  %1724 = vmatpush1.msra.mxu0 0.0
  %1725 = vmatprep.subr.mxu0 0.0
  %1726 = vmatpush1.msra.mxu0 0.0
  %1727 = vmatprep.subr.mxu0 0.0
  %1728 = vmatpush1.msra.mxu0 0.0
  %1729 = vmatprep.subr.mxu0 0.0
  %1730 = vmatpush1.msra.mxu0 0.0
  %1731 = vmatprep.subr.mxu0 0.0
  %1732 = vmatpush1.msra.mxu0 0.0
  %1733 = vmatprep.subr.mxu0 0.0
  %1734 = vmatpush1.msra.mxu0 0.0
  %1735 = vmatprep.subr.mxu0 0.0
  %1736 = vmatpush1.msra.mxu0 0.0
  %1737 = vmatprep.subr.mxu0 0.0
  %1738 = vmatpush1.msra.mxu0 0.0
  %1739 = vmatprep.subr.mxu0 0.0
  %1740 = vmatpush1.msra.mxu0 0.0
  %1741 = vmatprep.subr.mxu0 0.0
  %1742 = vmatpush1.msra.mxu0 0.0
  %1743 = vmatprep.subr.mxu0 0.0
  %1744 = vmatpush1.msra.mxu0 0.0
  %1745 = vmatprep.subr.mxu0 0.0
  %1746 = vmatpush1.msra.mxu0 0.0
  %1747 = vmatprep.subr.mxu0 0.0
  %1748 = vmatpush1.msra.mxu0 0.0
  %1749 = vmatprep.subr.mxu0 0.0
  %1750 = vmatpush1.msra.mxu0 0.0
  %1751 = vmatprep.mubr.f32.mxu0 0.0
  %1752 = vmatmul.mubr.f32.gmra.mrb[0].mxu0 %v1679
  %v1753 = vpop.f32.mrb[0].mxu0
  %v1754 = vadd.f32 0.0, %v1753
  %v1755 = vpop.f32.mrb[0].mxu0
  %1756 = vmatprep.mubr.f32.mxu0 0.0
  %1757 = vmatmul.mubr.f32.gmra.mrb[0].mxu0 %v1682
  %v1758 = vpop.f32.mrb[0].mxu0
  %v1759 = vadd.f32 0.0, %v1758
  %v1760 = vpop.f32.mrb[0].mxu0
  %1761 = vmatprep.mubr.f32.mxu0 0.0
  %1762 = vmatmul.mubr.f32.gmra.mrb[0].mxu0 %v1685
  %v1763 = vpop.f32.mrb[0].mxu0
  %v1764 = vadd.f32 0.0, %v1763
  %v1765 = vpop.f32.mrb[0].mxu0
  %1766 = vdwg.mxu0
  %v1767 = vadd.f32 %v1675, %v1754
  %v1768 = vadd.f32 %v1676, %v1759
  %v1769 = vadd.f32 %v1677, %v1764
  %v1771 = vsel %vm1131, %v1064, 0
  %v1774 = vsel %vm1131, %v1065, 0
  %v1777 = vsel %vm1131, %v1066, 0
  %1779 = vmatprep.subr.mxu0 0.0
  %1780 = vmatpush1.msra.mxu0 %v1123
  %1781 = vmatprep.subr.mxu0 0.0
  %1782 = vmatpush1.msra.mxu0 %v1124
  %1783 = vmatprep.subr.mxu0 0.0
  %1784 = vmatpush1.msra.mxu0 %v1125
  %1785 = vmatprep.subr.mxu0 0.0
  %1786 = vmatpush1.msra.mxu0 %v1126
  %1787 = vmatprep.subr.mxu0 0.0
  %1788 = vmatpush1.msra.mxu0 %v1127
  %1789 = vmatprep.subr.mxu0 0.0
  %1790 = vmatpush1.msra.mxu0 %v1128
  %1791 = vmatprep.subr.mxu0 0.0
  %1792 = vmatpush1.msra.mxu0 %v1129
  %1793 = vmatprep.subr.mxu0 0.0
  %1794 = vmatpush1.msra.mxu0 %v1130
  %1795 = vmatprep.subr.mxu0 0.0
  %1796 = vmatpush1.msra.mxu0 0.0
  %1797 = vmatprep.subr.mxu0 0.0
  %1798 = vmatpush1.msra.mxu0 0.0
  %1799 = vmatprep.subr.mxu0 0.0
  %1800 = vmatpush1.msra.mxu0 0.0
  %1801 = vmatprep.subr.mxu0 0.0
  %1802 = vmatpush1.msra.mxu0 0.0
  %1803 = vmatprep.subr.mxu0 0.0
  %1804 = vmatpush1.msra.mxu0 0.0
  %1805 = vmatprep.subr.mxu0 0.0
  %1806 = vmatpush1.msra.mxu0 0.0
  %1807 = vmatprep.subr.mxu0 0.0
  %1808 = vmatpush1.msra.mxu0 0.0
  %1809 = vmatprep.subr.mxu0 0.0
  %1810 = vmatpush1.msra.mxu0 0.0
  %1811 = vmatprep.subr.mxu0 0.0
  %1812 = vmatpush1.msra.mxu0 0.0
  %1813 = vmatprep.subr.mxu0 0.0
  %1814 = vmatpush1.msra.mxu0 0.0
  %1815 = vmatprep.subr.mxu0 0.0
  %1816 = vmatpush1.msra.mxu0 0.0
  %1817 = vmatprep.subr.mxu0 0.0
  %1818 = vmatpush1.msra.mxu0 0.0
  %1819 = vmatprep.subr.mxu0 0.0
  %1820 = vmatpush1.msra.mxu0 0.0
  %1821 = vmatprep.subr.mxu0 0.0
  %1822 = vmatpush1.msra.mxu0 0.0
  %1823 = vmatprep.subr.mxu0 0.0
  %1824 = vmatpush1.msra.mxu0 0.0
  %1825 = vmatprep.subr.mxu0 0.0
  %1826 = vmatpush1.msra.mxu0 0.0
  %1827 = vmatprep.subr.mxu0 0.0
  %1828 = vmatpush1.msra.mxu0 0.0
  %1829 = vmatprep.subr.mxu0 0.0
  %1830 = vmatpush1.msra.mxu0 0.0
  %1831 = vmatprep.subr.mxu0 0.0
  %1832 = vmatpush1.msra.mxu0 0.0
  %1833 = vmatprep.subr.mxu0 0.0
  %1834 = vmatpush1.msra.mxu0 0.0
  %1835 = vmatprep.subr.mxu0 0.0
  %1836 = vmatpush1.msra.mxu0 0.0
  %1837 = vmatprep.subr.mxu0 0.0
  %1838 = vmatpush1.msra.mxu0 0.0
  %1839 = vmatprep.subr.mxu0 0.0
  %1840 = vmatpush1.msra.mxu0 0.0
  %1841 = vmatprep.subr.mxu0 0.0
  %1842 = vmatpush1.msra.mxu0 0.0
  %1843 = vmatprep.mubr.f32.mxu0 0.0
  %1844 = vmatmul.mubr.f32.gmra.mrb[0].mxu0 %v1771
  %v1845 = vpop.f32.mrb[0].mxu0
  %v1846 = vadd.f32 0.0, %v1845
  %v1847 = vpop.f32.mrb[0].mxu0
  %1848 = vmatprep.mubr.f32.mxu0 0.0
  %1849 = vmatmul.mubr.f32.gmra.mrb[0].mxu0 %v1774
  %v1850 = vpop.f32.mrb[0].mxu0
  %v1851 = vadd.f32 0.0, %v1850
  %v1852 = vpop.f32.mrb[0].mxu0
  %1853 = vmatprep.mubr.f32.mxu0 0.0
  %1854 = vmatmul.mubr.f32.gmra.mrb[0].mxu0 %v1777
  %v1855 = vpop.f32.mrb[0].mxu0
  %v1856 = vadd.f32 0.0, %v1855
  %v1857 = vpop.f32.mrb[0].mxu0
  %1858 = vdwg.mxu0
  %v1859 = vadd.f32 %v1767, %v1846
  %v1860 = vadd.f32 %v1768, %v1851
  %v1861 = vadd.f32 %v1769, %v1856
  %v1862 = vld [vmem:[%s6] sm:$0x1]
  %v1864 = vlaneseq
  %v1865 = vshrl.u32 %v1864, 7
  %v1866 = vsub.s32 0, %v1865
  %v1867 = vrot.slane %v1862, %v1866
  %v1869 = vadd.f32 %v1859, %v1867
  %v1870 = vadd.f32 %v1860, %v1867
  %v1871 = vadd.f32 %v1861, %v1867
  %v1872 = vmax.f32 %v1869, 0.0
  %v1873 = vmax.f32 %v1870, 0.0
  %v1874 = vmax.f32 %v1871, 0.0
  %v1875 = vld [vmem:[%s7] sm:$0xff]
  %v1876 = vld [vmem:[%s7 + $0x8] sm:$0xff]
  %v1877 = vld [vmem:[%s7 + $0x10] sm:$0xff]
  %v1878 = vld [vmem:[%s7 + $0x18] sm:$0xff]
  %v1879 = vld [vmem:[%s7 + $0x20] sm:$0xff]
  %v1880 = vld [vmem:[%s7 + $0x28] sm:$0xff]
  %v1881 = vld [vmem:[%s7 + $0x30] sm:$0xff]
  %v1882 = vld [vmem:[%s7 + $0x38] sm:$0xff]
  %v1883 = vld [vmem:[%s8] sm:$0x1]
  %v1885 = vlaneseq
  %v1886 = vshrl.u32 %v1885, 7
  %v1887 = vsub.s32 0, %v1886
  %v1888 = vrot.slane %v1883, %v1887
  %v1891 = vsel %vm1131, %v1872, 0
  %v1894 = vsel %vm1131, %v1873, 0
  %v1897 = vsel %vm1131, %v1874, 0
  %1899 = vmatprep.subr.mxu0 0.0
  %1900 = vmatpush1.msra.mxu0 %v1875
  %1901 = vmatprep.subr.mxu0 0.0
  %1902 = vmatpush1.msra.mxu0 %v1876
  %1903 = vmatprep.subr.mxu0 0.0
  %1904 = vmatpush1.msra.mxu0 %v1877
  %1905 = vmatprep.subr.mxu0 0.0
  %1906 = vmatpush1.msra.mxu0 %v1878
  %1907 = vmatprep.subr.mxu0 0.0
  %1908 = vmatpush1.msra.mxu0 %v1879
  %1909 = vmatprep.subr.mxu0 0.0
  %1910 = vmatpush1.msra.mxu0 %v1880
  %1911 = vmatprep.subr.mxu0 0.0
  %1912 = vmatpush1.msra.mxu0 %v1881
  %1913 = vmatprep.subr.mxu0 0.0
  %1914 = vmatpush1.msra.mxu0 %v1882
  %1915 = vmatprep.subr.mxu0 0.0
  %1916 = vmatpush1.msra.mxu0 0.0
  %1917 = vmatprep.subr.mxu0 0.0
  %1918 = vmatpush1.msra.mxu0 0.0
  %1919 = vmatprep.subr.mxu0 0.0
  %1920 = vmatpush1.msra.mxu0 0.0
  %1921 = vmatprep.subr.mxu0 0.0
  %1922 = vmatpush1.msra.mxu0 0.0
  %1923 = vmatprep.subr.mxu0 0.0
  %1924 = vmatpush1.msra.mxu0 0.0
  %1925 = vmatprep.subr.mxu0 0.0
  %1926 = vmatpush1.msra.mxu0 0.0
  %1927 = vmatprep.subr.mxu0 0.0
  %1928 = vmatpush1.msra.mxu0 0.0
  %1929 = vmatprep.subr.mxu0 0.0
  %1930 = vmatpush1.msra.mxu0 0.0
  %1931 = vmatprep.subr.mxu0 0.0
  %1932 = vmatpush1.msra.mxu0 0.0
  %1933 = vmatprep.subr.mxu0 0.0
  %1934 = vmatpush1.msra.mxu0 0.0
  %1935 = vmatprep.subr.mxu0 0.0
  %1936 = vmatpush1.msra.mxu0 0.0
  %1937 = vmatprep.subr.mxu0 0.0
  %1938 = vmatpush1.msra.mxu0 0.0
  %1939 = vmatprep.subr.mxu0 0.0
  %1940 = vmatpush1.msra.mxu0 0.0
  %1941 = vmatprep.subr.mxu0 0.0
  %1942 = vmatpush1.msra.mxu0 0.0
  %1943 = vmatprep.subr.mxu0 0.0
  %1944 = vmatpush1.msra.mxu0 0.0
  %1945 = vmatprep.subr.mxu0 0.0
  %1946 = vmatpush1.msra.mxu0 0.0
  %1947 = vmatprep.subr.mxu0 0.0
  %1948 = vmatpush1.msra.mxu0 0.0
  %1949 = vmatprep.subr.mxu0 0.0
  %1950 = vmatpush1.msra.mxu0 0.0
  %1951 = vmatprep.subr.mxu0 0.0
  %1952 = vmatpush1.msra.mxu0 0.0
  %1953 = vmatprep.subr.mxu0 0.0
  %1954 = vmatpush1.msra.mxu0 0.0
  %1955 = vmatprep.subr.mxu0 0.0
  %1956 = vmatpush1.msra.mxu0 0.0
  %1957 = vmatprep.subr.mxu0 0.0
  %1958 = vmatpush1.msra.mxu0 0.0
  %1959 = vmatprep.subr.mxu0 0.0
  %1960 = vmatpush1.msra.mxu0 0.0
  %1961 = vmatprep.subr.mxu0 0.0
  %1962 = vmatpush1.msra.mxu0 0.0
  %1963 = vmatprep.mubr.f32.mxu0 0.0
  %1964 = vmatmul.mubr.f32.gmra.mrb[0].mxu0 %v1891
  %v1965 = vpop.f32.mrb[0].mxu0
  %v1966 = vadd.f32 %v1888, %v1965
  %v1967 = vpop.f32.mrb[0].mxu0
  %1968 = vmatprep.mubr.f32.mxu0 0.0
  %1969 = vmatmul.mubr.f32.gmra.mrb[0].mxu0 %v1894
  %v1970 = vpop.f32.mrb[0].mxu0
  %v1971 = vadd.f32 %v1888, %v1970
  %v1972 = vpop.f32.mrb[0].mxu0
  %1973 = vmatprep.mubr.f32.mxu0 0.0
  %1974 = vmatmul.mubr.f32.gmra.mrb[0].mxu0 %v1897
  %v1975 = vpop.f32.mrb[0].mxu0
  %v1976 = vadd.f32 %v1888, %v1975
  %v1977 = vpop.f32.mrb[0].mxu0
  %1978 = vdwg.mxu0
  %v1979 = vmax.f32 %v1966, 0.0
  %v1980 = vmax.f32 %v1971, 0.0
  %v1981 = vmax.f32 %v1976, 0.0
  %v1982 = vmax.f32 %v1979, %v1980
  %v1983 = vmax.f32 %v1982, %v1981
  %1984 = vst [vmem:[%s12] sm:$0xff] %v1983
  %v1985 = vld [vmem:[%s9] sm:$0xff]
  %v1986 = vld [vmem:[%s9 + $0x8] sm:$0xff]
  %v1987 = vld [vmem:[%s9 + $0x10] sm:$0xff]
  %v1988 = vld [vmem:[%s9 + $0x18] sm:$0xff]
  %v1989 = vld [vmem:[%s9 + $0x20] sm:$0xff]
  %v1990 = vld [vmem:[%s9 + $0x28] sm:$0xff]
  %v1991 = vld [vmem:[%s9 + $0x30] sm:$0xff]
  %v1992 = vld [vmem:[%s9 + $0x38] sm:$0xff]
  %v1993 = vld [vmem:[%s9 + $0x40] sm:$0xff]
  %v1994 = vld [vmem:[%s9 + $0x48] sm:$0xff]
  %v1995 = vld [vmem:[%s9 + $0x50] sm:$0xff]
  %v1996 = vld [vmem:[%s9 + $0x58] sm:$0xff]
  %v1997 = vld [vmem:[%s9 + $0x60] sm:$0xff]
  %v1998 = vld [vmem:[%s9 + $0x68] sm:$0xff]
  %v1999 = vld [vmem:[%s9 + $0x70] sm:$0xff]
  %v2000 = vld [vmem:[%s9 + $0x78] sm:$0xff]
  %v2001 = vld [vmem:[%s10] sm:$0x1]
  %v2003 = vlaneseq
  %v2004 = vshrl.u32 %v2003, 7
  %v2005 = vsub.s32 0, %v2004
  %v2006 = vrot.slane %v2001, %v2005
  %2008 = vmatprep.subr.mxu0 0.0
  %2009 = vmatpush1.msra.mxu0 %v1985
  %2010 = vmatprep.subr.mxu0 0.0
  %2011 = vmatpush1.msra.mxu0 %v1986
  %2012 = vmatprep.subr.mxu0 0.0
  %2013 = vmatpush1.msra.mxu0 %v1987
  %2014 = vmatprep.subr.mxu0 0.0
  %2015 = vmatpush1.msra.mxu0 %v1988
  %2016 = vmatprep.subr.mxu0 0.0
  %2017 = vmatpush1.msra.mxu0 %v1989
  %2018 = vmatprep.subr.mxu0 0.0
  %2019 = vmatpush1.msra.mxu0 %v1990
  %2020 = vmatprep.subr.mxu0 0.0
  %2021 = vmatpush1.msra.mxu0 %v1991
  %2022 = vmatprep.subr.mxu0 0.0
  %2023 = vmatpush1.msra.mxu0 %v1992
  %2024 = vmatprep.subr.mxu0 0.0
  %2025 = vmatpush1.msra.mxu0 %v1993
  %2026 = vmatprep.subr.mxu0 0.0
  %2027 = vmatpush1.msra.mxu0 %v1994
  %2028 = vmatprep.subr.mxu0 0.0
  %2029 = vmatpush1.msra.mxu0 %v1995
  %2030 = vmatprep.subr.mxu0 0.0
  %2031 = vmatpush1.msra.mxu0 %v1996
  %2032 = vmatprep.subr.mxu0 0.0
  %2033 = vmatpush1.msra.mxu0 %v1997
  %2034 = vmatprep.subr.mxu0 0.0
  %2035 = vmatpush1.msra.mxu0 %v1998
  %2036 = vmatprep.subr.mxu0 0.0
  %2037 = vmatpush1.msra.mxu0 %v1999
  %2038 = vmatprep.subr.mxu0 0.0
  %2039 = vmatpush1.msra.mxu0 %v2000
  %2040 = vmatprep.subr.mxu0 0.0
  %2041 = vmatpush1.msra.mxu0 0.0
  %2042 = vmatprep.subr.mxu0 0.0
  %2043 = vmatpush1.msra.mxu0 0.0
  %2044 = vmatprep.subr.mxu0 0.0
  %2045 = vmatpush1.msra.mxu0 0.0
  %2046 = vmatprep.subr.mxu0 0.0
  %2047 = vmatpush1.msra.mxu0 0.0
  %2048 = vmatprep.subr.mxu0 0.0
  %2049 = vmatpush1.msra.mxu0 0.0
  %2050 = vmatprep.subr.mxu0 0.0
  %2051 = vmatpush1.msra.mxu0 0.0
  %2052 = vmatprep.subr.mxu0 0.0
  %2053 = vmatpush1.msra.mxu0 0.0
  %2054 = vmatprep.subr.mxu0 0.0
  %2055 = vmatpush1.msra.mxu0 0.0
  %2056 = vmatprep.subr.mxu0 0.0
  %2057 = vmatpush1.msra.mxu0 0.0
  %2058 = vmatprep.subr.mxu0 0.0
  %2059 = vmatpush1.msra.mxu0 0.0
  %2060 = vmatprep.subr.mxu0 0.0
  %2061 = vmatpush1.msra.mxu0 0.0
  %2062 = vmatprep.subr.mxu0 0.0
  %2063 = vmatpush1.msra.mxu0 0.0
  %2064 = vmatprep.subr.mxu0 0.0
  %2065 = vmatpush1.msra.mxu0 0.0
  %2066 = vmatprep.subr.mxu0 0.0
  %2067 = vmatpush1.msra.mxu0 0.0
  %2068 = vmatprep.subr.mxu0 0.0
  %2069 = vmatpush1.msra.mxu0 0.0
  %2070 = vmatprep.subr.mxu0 0.0
  %2071 = vmatpush1.msra.mxu0 0.0
  %2072 = vmatprep.mubr.f32.mxu0 0.0
  %2073 = vmatmul.mubr.f32.gmra.mrb[0].mxu0 %v1983
  %v2074 = vpop.f32.mrb[0].mxu0
  %v2075 = vadd.f32 %v2006, %v2074
  %v2076 = vpop.f32.mrb[0].mxu0
  %2077 = vdwg.mxu0
  %2078 = vst [vmem:[%s11] sm:$0xff] %v2075
  // Predicated region
  $region46: #{mvcnn_shrec17_forward.1} parent=0 // pred_check
    _
  $region47: #{mvcnn_shrec17_forward.1} parent=0 // pred_check_branch
    %2080 = sbr.rel (0) target = $region49
  $region48: #{mvcnn_shrec17_forward.1} parent=0 // pred_region
    _
  $region49: #{mvcnn_shrec17_forward.1} parent=0 // pred_fallthru
    _
  // Predicated region
  $region50: #{mvcnn_shrec17_forward.1} parent=0 // pred_check
    _
  $region51: #{mvcnn_shrec17_forward.1} parent=0 // pred_check_branch
    %2082 = sbr.rel (0) target = $region53
  $region52: #{mvcnn_shrec17_forward.1} parent=0 // pred_region
    _
  $region53: #{mvcnn_shrec17_forward.1} parent=0 // pred_fallthru
    _
  // Predicated region
  $region54: #{mvcnn_shrec17_forward.1} parent=0 // pred_check
    _
  $region55: #{mvcnn_shrec17_forward.1} parent=0 // pred_check_branch
    %2084 = sbr.rel (0) target = $region57
  $region56: #{mvcnn_shrec17_forward.1} parent=0 // pred_region
    _
  $region57: #{mvcnn_shrec17_forward.1} parent=0 // pred_fallthru
    _
  // Predicated region
  $region58: #{mvcnn_shrec17_forward.1} parent=0 // pred_check
    _
  $region59: #{mvcnn_shrec17_forward.1} parent=0 // pred_check_branch
    %2086 = sbr.rel (0) target = $region61
  $region60: #{mvcnn_shrec17_forward.1} parent=0 // pred_region
    _
  $region61: #{mvcnn_shrec17_forward.1} parent=0 // pred_fallthru
    _

</llo_original>
